<compile_context>
chip_gen: v7x
topology: tpu7x:2x2x1
jax: 0.10.0
libtpu: 0.0.40
codegen_flags: <defaults>
</compile_context>

<pallas_src>
import math

import numpy as np
import jax
import jax.numpy as jnp
from jax.experimental import pallas as pl
from jax.experimental.pallas import tpu as pltpu

# ----------------------------- configuration (small) -----------------------------
OMIC_DIM  = 256            # omic_input_dim
EMB       = 32             # embedding_size
NUM_LAYER = 2
NHEAD     = 8
HEAD_DIM  = EMB // NHEAD   # 4
FFN       = 2 * EMB        # dim_feedforward
N_CLASSES = 4
TOKENS    = OMIC_DIM // EMB   # token_num = 8
BATCH     = 2
LN_EPS    = 1e-5

SLAB_LANES = 256


# --------------------------- compact parameter layouts ----------------------------
def _build_weight_layout():
    """bf16 weight slab.  Two weight matrices share each row-block (lane 0 / lane 128);
    all row starts are multiples of 16 (bf16 sublane tile), all lane starts are 0/128."""
    ent = {}

    def put(name, row, col, nrows, ncols):
        ent[name] = (row, col, nrows, ncols)

    put('wfc', 0, 0, OMIC_DIM, TOKENS * EMB)          # rows 0..255, full 256 lanes
    r = OMIC_DIM

    def pair(a, ash, b, bsh, height):
        nonlocal r
        put(a, r, 0, ash[0], ash[1])
        put(b, r, 128, bsh[0], bsh[1])
        r += height

    pair('wqkv0', (EMB, 3 * EMB), 'wqkv1', (EMB, 3 * EMB), 32)
    pair('w10',   (EMB, FFN),     'w11',   (EMB, FFN),     32)
    pair('w20',   (FFN, EMB),     'w21',   (FFN, EMB),     64)
    pair('wo0',   (EMB, EMB),     'wo1',   (EMB, EMB),     32)
    pair('wa1',   (EMB, EMB),     'wc',    (EMB, N_CLASSES), 32)
    pair('gsum',  (EMB, NHEAD),   'gexp',  (NHEAD, EMB),   32)
    return ent, r                                      # 480 rows


def _build_vector_layout():
    """f32 bias / LayerNorm slab: 1-row vectors, two per row (lane 0 / lane 128)."""
    ent = {'bfc': (0, 0, 1, TOKENS * EMB)}
    vecs = []
    for l in range(NUM_LAYER):
        vecs += [(f'bqkv{l}', 3 * EMB), (f'bo{l}', EMB),
                 (f'ln1w{l}', EMB), (f'ln1b{l}', EMB),
                 (f'b1{l}', FFN), (f'b2{l}', EMB),
                 (f'ln2w{l}', EMB), (f'ln2b{l}', EMB)]
    vecs += [('ba1', EMB), ('wa2', EMB), ('ba2', 1), ('bc', N_CLASSES)]
    for i, (nm, w) in enumerate(vecs):
        ent[nm] = (1 + i // 2, 128 * (i % 2), 1, w)
    rows = 1 + (len(vecs) + 1) // 2
    rows = (rows + 7) // 8 * 8                         # pad to sublane multiple -> 16
    return ent, rows


W_LAYOUT, W_ROWS = _build_weight_layout()              # (480, 256) bf16  ~240 KB
V_LAYOUT, V_ROWS = _build_vector_layout()              # (16, 256)  f32   ~16 KB


# --------------------------------- Pallas kernel ----------------------------------
def genomic_kernel(x_ref, w_ref, v_ref, out_ref):
    f32, bf16 = jnp.float32, jnp.bfloat16
    x = x_ref[...]                               # (B, OMIC) f32
    B = x.shape[0]
    BT = B * TOKENS

    def wmat(name):                              # bf16 weight tile (MXU operand)
        r, c, nr, nc = W_LAYOUT[name]
        return w_ref[r:r + nr, c:c + nc]

    def vrow(name):                              # f32 bias / LN row (VPU operand)
        r, c, _, nc = V_LAYOUT[name]
        return v_ref[r:r + 1, c:c + nc]

    def mm(a, name):                             # bf16 x bf16 MXU matmul, f32 accumulate
        return jnp.dot(a.astype(bf16), wmat(name), preferred_element_type=f32)

    def layer_norm(u, wn, bn):                   # torch LN: biased variance, eps in sqrt
        mu = jnp.mean(u, axis=-1, keepdims=True)
        d = u - mu
        var = jnp.mean(d * d, axis=-1, keepdims=True)
        return d * jax.lax.rsqrt(var + LN_EPS) * vrow(wn) + vrow(bn)

    # ---- SNN_Block: ONE (B,256)@(256,256) matmul + ELU(alpha=1) ----
    h = mm(x, 'wfc') + vrow('bfc')                                    # (B, 256) f32
    h = jnp.where(h > 0, h, jnp.exp(jnp.minimum(h, 0.0)) - 1.0)       # ELU

    # Token split -> (B*T, E), rows ordered b*T+t.
    # NOTE: kept as static 32-lane slices + stack (proven lowering); a minor-dim-splitting
    #       reshape (2,256)->(2,8,32) is not guaranteed to lower in Mosaic.
    parts = [h[:, t * EMB:(t + 1) * EMB] for t in range(TOKENS)]
    zf = jnp.stack(parts, axis=1).reshape(BT, EMB)                    # (B*T, E) f32

    gsum = wmat('gsum')     # (E, H) 0/1: sums the 4 lanes of each head
    gexp = wmat('gexp')     # (H, E) 0/1: expands per-head scalars back to lanes

    # ---- TransformerEncoder: post-norm layers, attention over the B (seq) axis ----
    for l in range(NUM_LAYER):
        # fused QKV projection (1/sqrt(Dh) already folded into the q columns)
        qkv = mm(zf, f'wqkv{l}') + vrow(f'bqkv{l}')                   # (B*T, 3E)
        q3 = qkv[:, 0 * EMB:1 * EMB].reshape(B, TOKENS, EMB)
        k3 = qkv[:, 1 * EMB:2 * EMB].reshape(B, TOKENS, EMB)
        v3 = qkv[:, 2 * EMB:3 * EMB].reshape(B, TOKENS, EMB)

        # scores for ALL heads and BOTH attended samples in ONE MXU push:
        #   rows of qk ordered c*BT + b*T + t  (c = attended sample index)
        qk = jnp.concatenate(
            [(q3 * k3[c:c + 1]).reshape(BT, EMB) for c in range(B)], axis=0)   # (B*BT, E)
        sc = jnp.dot(qk.astype(bf16), gsum, preferred_element_type=f32)        # (B*BT, H)

        # softmax across the attended-sample axis c (B is tiny & static -> unrolled VPU)
        scs = [sc[c * BT:(c + 1) * BT, :] for c in range(B)]
        m = scs[0]
        for c in range(1, B):
            m = jnp.maximum(m, scs[c])
        ps = [jnp.exp(s - m) for s in scs]
        denom = ps[0]
        for c in range(1, B):
            denom = denom + ps[c]
        inv = pl.reciprocal(denom, approx=True)                                # EUP slot
        probs = jnp.concatenate([p * inv for p in ps], axis=0)                 # (B*BT, H)

        # head-scalar -> lane expansion for both samples in ONE MXU push; the remaining
        # per-sample work is only a broadcasted multiply + add on the VPU.
        pexp = jnp.dot(probs.astype(bf16), gexp, preferred_element_type=f32)   # (B*BT, E)
        out3 = None
        for c in range(B):
            t3 = pexp[c * BT:(c + 1) * BT, :].reshape(B, TOKENS, EMB) * v3[c:c + 1]
            out3 = t3 if out3 is None else out3 + t3                            # (B, T, E)

        att = mm(out3.reshape(BT, EMB), f'wo{l}') + vrow(f'bo{l}')              # (B*T, E)
        zf = layer_norm(zf + att, f'ln1w{l}', f'ln1b{l}')

        f1 = jnp.maximum(mm(zf, f'w1{l}') + vrow(f'b1{l}'), 0.0)                # (B*T, FFN)
        f2 = mm(f1, f'w2{l}') + vrow(f'b2{l}')                                  # (B*T, E)
        zf = layer_norm(zf + f2, f'ln2w{l}', f'ln2b{l}')

    # ---- AMIL attention pooling over the token axis T (exact normalization) ----
    a1 = jnp.tanh(mm(zf, 'wa1') + vrow('ba1'))                        # (B*T, E)
    zf3 = zf.reshape(B, TOKENS, EMB)
    e = jnp.sum(a1.reshape(B, TOKENS, EMB) * vrow('wa2')[None], axis=-1)        # (B, T)
    e = e + vrow('ba2')
    e = e - jnp.max(e, axis=-1, keepdims=True)
    ex = jnp.exp(e)
    A = ex / jnp.sum(ex, axis=-1, keepdims=True)                      # exact divide
    M = jnp.sum(A[:, :, None] * zf3, axis=1)                          # (B, E)

    # ---- classifier ----
    logits = mm(M, 'wc') + vrow('bc')                                 # (B, n_classes)

    # single lane-packed output: [logits | AMIL attention]
    out_ref[...] = jnp.concatenate([logits, A], axis=-1)              # (B, 12)


# ------------------------------------ wrapper --------------------------------------
VMEM_SPEC = pl.BlockSpec(memory_space=pltpu.MemorySpace.VMEM)


@jax.jit
def genomic_transformer_forward(x_omic, wslab, vslab):
    if x_omic.ndim == 1:
        x_omic = x_omic[None, :]
    B = x_omic.shape[0]
    bytes_accessed = (W_ROWS * SLAB_LANES * 2 + V_ROWS * SLAB_LANES * 4
                      + 4 * B * (OMIC_DIM + N_CLASSES + TOKENS))
    fused = pl.pallas_call(
        genomic_kernel,
        out_shape=jax.ShapeDtypeStruct((B, N_CLASSES + TOKENS), jnp.float32),
        in_specs=[VMEM_SPEC, VMEM_SPEC, VMEM_SPEC],
        out_specs=VMEM_SPEC,
        cost_estimate=pl.CostEstimate(flops=1_000_000, transcendentals=2_000,
                                      bytes_accessed=bytes_accessed),
    )(x_omic, wslab, vslab)

    logits = fused[:, :N_CLASSES]
    attn = fused[:, N_CLASSES:]

    # cheap XLA glue matching the PyTorch tail
    hazards = jax.nn.sigmoid(logits)
    survival = jnp.cumprod(1.0 - hazards, axis=1)
    y_hat = jnp.argmax(logits, axis=1).reshape(B, 1)        # torch.topk(logits, 1)[1]
    attention = attn[:, None, :]                            # (B, 1, T)
    return {'hazards': hazards, 'survival': survival,
            'y_hat': y_hat, 'attention_scores': attention}


# ------------------------------ deterministic params -------------------------------
def init_params(key):
    ks = iter(jax.random.split(key, 40))

    def lin(fan_in, fan_out):
        bound = 1.0 / math.sqrt(fan_in)
        w = jax.random.uniform(next(ks), (fan_in, fan_out), jnp.float32, -bound, bound)
        b = jax.random.uniform(next(ks), (fan_out,), jnp.float32, -bound, bound)
        return w, b

    p = {}
    p['wfc'], p['bfc'] = lin(OMIC_DIM, TOKENS * EMB)
    for nm, fi, fo in (('q', EMB, EMB), ('k', EMB, EMB), ('v', EMB, EMB),
                       ('o', EMB, EMB), ('1', EMB, FFN), ('2', FFN, EMB)):
        ws, bs = [], []
        for _ in range(NUM_LAYER):
            w, b = lin(fi, fo)
            ws.append(w); bs.append(b)
        p['w' + nm], p['b' + nm] = ws, bs
    p['ln1w'] = [jnp.ones((EMB,), jnp.float32)] * NUM_LAYER
    p['ln1b'] = [jnp.zeros((EMB,), jnp.float32)] * NUM_LAYER
    p['ln2w'] = [jnp.ones((EMB,), jnp.float32)] * NUM_LAYER
    p['ln2b'] = [jnp.zeros((EMB,), jnp.float32)] * NUM_LAYER
    p['wa1'], p['ba1'] = lin(EMB, EMB)
    p['wa2'], p['ba2'] = lin(EMB, 1)
    p['wc'], p['bc'] = lin(EMB, N_CLASSES)
    return p


def pack_params(p):
    """Pack all parameters into one compact bf16 weight slab + one small f32 bias slab."""
    wslab = np.zeros((W_ROWS, SLAB_LANES), np.float32)
    vslab = np.zeros((V_ROWS, SLAB_LANES), np.float32)

    def putw(name, arr):
        arr = np.asarray(arr, np.float32)
        r, c, nr, nc = W_LAYOUT[name]
        assert arr.shape == (nr, nc), (name, arr.shape, (nr, nc))
        wslab[r:r + nr, c:c + nc] = arr

    def putv(name, arr):
        arr = np.asarray(arr, np.float32)
        if arr.ndim == 1:
            arr = arr[None, :]
        r, c, nr, nc = V_LAYOUT[name]
        assert arr.shape == (nr, nc), (name, arr.shape, (nr, nc))
        vslab[r:r + nr, c:c + nc] = arr

    putw('wfc', p['wfc']); putv('bfc', p['bfc'])
    scale = 1.0 / math.sqrt(HEAD_DIM)
    for l in range(NUM_LAYER):
        wqkv = np.concatenate([np.asarray(p['wq'][l]) * scale,
                               np.asarray(p['wk'][l]),
                               np.asarray(p['wv'][l])], axis=1)        # (E, 3E)
        bqkv = np.concatenate([np.asarray(p['bq'][l]) * scale,
                               np.asarray(p['bk'][l]),
                               np.asarray(p['bv'][l])], axis=0)        # (3E,)
        putw(f'wqkv{l}', wqkv); putv(f'bqkv{l}', bqkv)
        putw(f'wo{l}', p['wo'][l]); putv(f'bo{l}', p['bo'][l])
        putv(f'ln1w{l}', p['ln1w'][l]); putv(f'ln1b{l}', p['ln1b'][l])
        putw(f'w1{l}', p['w1'][l]); putv(f'b1{l}', p['b1'][l])
        putw(f'w2{l}', p['w2'][l]); putv(f'b2{l}', p['b2'][l])
        putv(f'ln2w{l}', p['ln2w'][l]); putv(f'ln2b{l}', p['ln2b'][l])
    putw('wa1', p['wa1']); putv('ba1', p['ba1'])
    putv('wa2', np.asarray(p['wa2']).reshape(1, EMB))
    putv('ba2', np.asarray(p['ba2']).reshape(1, 1))
    putw('wc', p['wc']); putv('bc', p['bc'])
    head_of_lane = np.arange(EMB) // HEAD_DIM
    gsum = (head_of_lane[:, None] == np.arange(NHEAD)[None, :]).astype(np.float32)  # (E, H)
    putw('gsum', gsum)
    putw('gexp', gsum.T)                                                             # (H, E)
    return jnp.asarray(wslab, dtype=jnp.bfloat16), jnp.asarray(vslab, dtype=jnp.float32)


# ------------------------------- pure-JAX reference --------------------------------
def reference_forward(x, p):
    h = x @ p['wfc'] + p['bfc']
    h = jnp.where(h > 0, h, jnp.exp(jnp.minimum(h, 0.0)) - 1.0)
    B = x.shape[0]
    z = h.reshape(B, TOKENS, EMB)
    scale = 1.0 / math.sqrt(HEAD_DIM)

    def ln(u, w, b):
        mu = u.mean(-1, keepdims=True)
        var = ((u - mu) ** 2).mean(-1, keepdims=True)
        return (u - mu) / jnp.sqrt(var + LN_EPS) * w + b

    for l in range(NUM_LAYER):
        q = (z @ p['wq'][l] + p['bq'][l]).reshape(B, TOKENS, NHEAD, HEAD_DIM)
        k = (z @ p['wk'][l] + p['bk'][l]).reshape(B, TOKENS, NHEAD, HEAD_DIM)
        v = (z @ p['wv'][l] + p['bv'][l]).reshape(B, TOKENS, NHEAD, HEAD_DIM)
        sc = jnp.einsum('bthd,cthd->thbc', q, k) * scale       # attention over sample axis
        pr = jax.nn.softmax(sc, axis=-1)
        o = jnp.einsum('thbc,cthd->bthd', pr, v).reshape(B, TOKENS, EMB)
        o = o @ p['wo'][l] + p['bo'][l]
        z = ln(z + o, p['ln1w'][l], p['ln1b'][l])
        f = jnp.maximum(z @ p['w1'][l] + p['b1'][l], 0.0)
        f = f @ p['w2'][l] + p['b2'][l]
        z = ln(z + f, p['ln2w'][l], p['ln2b'][l])
    a1 = jnp.tanh(z @ p['wa1'] + p['ba1'])
    e = (a1 @ p['wa2'])[..., 0] + p['ba2'][0]
    A = jax.nn.softmax(e, axis=-1)                              # (B, T)
    M = jnp.einsum('bt,bte->be', A, z)
    logits = M @ p['wc'] + p['bc']
    return logits, A


# --------------------------------------- main ---------------------------------------
if __name__ == "__main__":
    key = jax.random.PRNGKey(0)
    pkey, xkey = jax.random.split(key)
    params = init_params(pkey)
    wslab, vslab = pack_params(params)
    x_omic = jax.random.normal(xkey, (BATCH, OMIC_DIM), jnp.float32)

    res = genomic_transformer_forward(x_omic, wslab, vslab)
    jax.block_until_ready(res)

    assert res['hazards'].shape == (BATCH, N_CLASSES)
    assert res['survival'].shape == (BATCH, N_CLASSES)
    assert res['y_hat'].shape == (BATCH, 1)
    assert res['attention_scores'].shape == (BATCH, 1, TOKENS)
    assert bool(jnp.all(jnp.isfinite(res['hazards'])))
    assert bool(jnp.all(jnp.isfinite(res['survival'])))

    # cross-check against a pure-JAX/XLA f32 reference of the same forward pass
    with jax.default_matmul_precision('float32'):
        ref_logits, ref_A = reference_forward(x_omic, params)
    ref_hazards = jax.nn.sigmoid(ref_logits)
    assert bool(jnp.all(jnp.abs(res['hazards'] - ref_hazards) < 2e-2))
    assert bool(jnp.all(jnp.abs(res['attention_scores'][:, 0, :] - ref_A) < 2e-2))

    print("KERNEL_OK")
</pallas_src>

<mosaic_0001>
module attributes {stable_mosaic.version = 11 : i64} {
  func.func @genomic_kernel(%arg0: memref<2x256xf32, #tpu.memory_space<vmem>>, %arg1: memref<480x256xbf16, #tpu.memory_space<vmem>>, %arg2: memref<16x256xf32, #tpu.memory_space<vmem>>, %arg3: memref<2x12xf32, #tpu.memory_space<vmem>>) attributes {dimension_semantics = [], scalar_prefetch = 0 : i64, scratch_operands = 0 : i64, tpu.core_type = #tpu.core_type<tc>} {
    %c0 = arith.constant 0 : index
    %c0_0 = arith.constant 0 : index
    %0 = vector.load %arg0[%c0, %c0_0] : memref<2x256xf32, #tpu.memory_space<vmem>>, vector<2x256xf32>
    %1 = arith.truncf %0 : vector<2x256xf32> to vector<2x256xbf16>
    %c0_1 = arith.constant 0 : index
    %c0_2 = arith.constant 0 : index
    %2 = vector.load %arg1[%c0_1, %c0_2] : memref<480x256xbf16, #tpu.memory_space<vmem>>, vector<256x256xbf16>
    %cst = arith.constant dense<0.000000e+00> : vector<2x256xf32>
    %3 = tpu.matmul %1, %2, %cst {dimension_numbers = #tpu.dot_dimension_numbers<[1], [0], [0], [1], [0, 0, 1, 1], [], []>} : vector<2x256xbf16>, vector<256x256xbf16>, vector<2x256xf32> -> vector<2x256xf32>
    %c0_3 = arith.constant 0 : index
    %c0_4 = arith.constant 0 : index
    %4 = vector.load %arg2[%c0_3, %c0_4] : memref<16x256xf32, #tpu.memory_space<vmem>>, vector<1x256xf32>
    %5 = vector.broadcast %4 : vector<1x256xf32> to vector<2x256xf32>
    %6 = arith.addf %3, %5 : vector<2x256xf32>
    %cst_5 = arith.constant 0.000000e+00 : f32
    %7 = vector.broadcast %cst_5 : f32 to vector<2x256xf32>
    %8 = arith.cmpf ogt, %6, %7 : vector<2x256xf32>
    %cst_6 = arith.constant 0.000000e+00 : f32
    %9 = vector.broadcast %cst_6 : f32 to vector<2x256xf32>
    %10 = arith.minimumf %6, %9 : vector<2x256xf32>
    %11 = math.exp %10 : vector<2x256xf32>
    %cst_7 = arith.constant 1.000000e+00 : f32
    %12 = vector.broadcast %cst_7 : f32 to vector<2x256xf32>
    %13 = arith.subf %11, %12 : vector<2x256xf32>
    %14 = arith.select %8, %6, %13 : vector<2x256xi1>, vector<2x256xf32>
    %15 = vector.extract_strided_slice %14 {offsets = [0, 0], sizes = [2, 32], strides = [1, 1]} : vector<2x256xf32> to vector<2x32xf32>
    %16 = vector.extract_strided_slice %14 {offsets = [0, 32], sizes = [2, 32], strides = [1, 1]} : vector<2x256xf32> to vector<2x32xf32>
    %17 = vector.extract_strided_slice %14 {offsets = [0, 64], sizes = [2, 32], strides = [1, 1]} : vector<2x256xf32> to vector<2x32xf32>
    %18 = vector.extract_strided_slice %14 {offsets = [0, 96], sizes = [2, 32], strides = [1, 1]} : vector<2x256xf32> to vector<2x32xf32>
    %19 = vector.extract_strided_slice %14 {offsets = [0, 128], sizes = [2, 32], strides = [1, 1]} : vector<2x256xf32> to vector<2x32xf32>
    %20 = vector.extract_strided_slice %14 {offsets = [0, 160], sizes = [2, 32], strides = [1, 1]} : vector<2x256xf32> to vector<2x32xf32>
    %21 = vector.extract_strided_slice %14 {offsets = [0, 192], sizes = [2, 32], strides = [1, 1]} : vector<2x256xf32> to vector<2x32xf32>
    %22 = vector.extract_strided_slice %14 {offsets = [0, 224], sizes = [2, 32], strides = [1, 1]} : vector<2x256xf32> to vector<2x32xf32>
    %23 = vector.shape_cast %15 : vector<2x32xf32> to vector<2x1x32xf32>
    %24 = vector.shape_cast %16 : vector<2x32xf32> to vector<2x1x32xf32>
    %25 = vector.shape_cast %17 : vector<2x32xf32> to vector<2x1x32xf32>
    %26 = vector.shape_cast %18 : vector<2x32xf32> to vector<2x1x32xf32>
    %27 = vector.shape_cast %19 : vector<2x32xf32> to vector<2x1x32xf32>
    %28 = vector.shape_cast %20 : vector<2x32xf32> to vector<2x1x32xf32>
    %29 = vector.shape_cast %21 : vector<2x32xf32> to vector<2x1x32xf32>
    %30 = vector.shape_cast %22 : vector<2x32xf32> to vector<2x1x32xf32>
    %31 = tpu.concatenate %23, %24, %25, %26, %27, %28, %29, %30 in 1 : vector<2x1x32xf32>, vector<2x1x32xf32>, vector<2x1x32xf32>, vector<2x1x32xf32>, vector<2x1x32xf32>, vector<2x1x32xf32>, vector<2x1x32xf32>, vector<2x1x32xf32> -> vector<2x8x32xf32>
    %32 = vector.shape_cast %31 : vector<2x8x32xf32> to vector<16x32xf32>
    %c448 = arith.constant 448 : index
    %c0_8 = arith.constant 0 : index
    %33 = vector.load %arg1[%c448, %c0_8] : memref<480x256xbf16, #tpu.memory_space<vmem>>, vector<32x8xbf16>
    %c448_9 = arith.constant 448 : index
    %c128 = arith.constant 128 : index
    %34 = vector.load %arg1[%c448_9, %c128] : memref<480x256xbf16, #tpu.memory_space<vmem>>, vector<8x32xbf16>
    %35 = arith.truncf %32 : vector<16x32xf32> to vector<16x32xbf16>
    %c256 = arith.constant 256 : index
    %c0_10 = arith.constant 0 : index
    %36 = vector.load %arg1[%c256, %c0_10] : memref<480x256xbf16, #tpu.memory_space<vmem>>, vector<32x96xbf16>
    %cst_11 = arith.constant dense<0.000000e+00> : vector<16x96xf32>
    %37 = tpu.matmul %35, %36, %cst_11 {dimension_numbers = #tpu.dot_dimension_numbers<[1], [0], [0], [1], [0, 0, 1, 1], [], []>} : vector<16x32xbf16>, vector<32x96xbf16>, vector<16x96xf32> -> vector<16x96xf32>
    %c1 = arith.constant 1 : index
    %c0_12 = arith.constant 0 : index
    %38 = vector.load %arg2[%c1, %c0_12] : memref<16x256xf32, #tpu.memory_space<vmem>>, vector<1x96xf32>
    %39 = vector.broadcast %38 : vector<1x96xf32> to vector<16x96xf32>
    %40 = arith.addf %37, %39 : vector<16x96xf32>
    %41 = vector.extract_strided_slice %40 {offsets = [0, 0], sizes = [16, 32], strides = [1, 1]} : vector<16x96xf32> to vector<16x32xf32>
    %42 = vector.shape_cast %41 : vector<16x32xf32> to vector<2x8x32xf32>
    %43 = vector.extract_strided_slice %40 {offsets = [0, 32], sizes = [16, 32], strides = [1, 1]} : vector<16x96xf32> to vector<16x32xf32>
    %44 = vector.shape_cast %43 : vector<16x32xf32> to vector<2x8x32xf32>
    %45 = vector.extract_strided_slice %40 {offsets = [0, 64], sizes = [16, 32], strides = [1, 1]} : vector<16x96xf32> to vector<16x32xf32>
    %46 = vector.shape_cast %45 : vector<16x32xf32> to vector<2x8x32xf32>
    %47 = vector.extract_strided_slice %44 {offsets = [0, 0, 0], sizes = [1, 8, 32], strides = [1, 1, 1]} : vector<2x8x32xf32> to vector<1x8x32xf32>
    %48 = vector.broadcast %47 : vector<1x8x32xf32> to vector<2x8x32xf32>
    %49 = arith.mulf %42, %48 : vector<2x8x32xf32>
    %50 = vector.shape_cast %49 : vector<2x8x32xf32> to vector<16x32xf32>
    %51 = vector.extract_strided_slice %44 {offsets = [1, 0, 0], sizes = [1, 8, 32], strides = [1, 1, 1]} : vector<2x8x32xf32> to vector<1x8x32xf32>
    %52 = vector.broadcast %51 : vector<1x8x32xf32> to vector<2x8x32xf32>
    %53 = arith.mulf %42, %52 : vector<2x8x32xf32>
    %54 = vector.shape_cast %53 : vector<2x8x32xf32> to vector<16x32xf32>
    %55 = tpu.concatenate %50, %54 in 0 : vector<16x32xf32>, vector<16x32xf32> -> vector<32x32xf32>
    %56 = arith.truncf %55 : vector<32x32xf32> to vector<32x32xbf16>
    %cst_13 = arith.constant dense<0.000000e+00> : vector<32x8xf32>
    %57 = tpu.matmul %56, %33, %cst_13 {dimension_numbers = #tpu.dot_dimension_numbers<[1], [0], [0], [1], [0, 0, 1, 1], [], []>} : vector<32x32xbf16>, vector<32x8xbf16>, vector<32x8xf32> -> vector<32x8xf32>
    %58 = vector.extract_strided_slice %57 {offsets = [0, 0], sizes = [16, 8], strides = [1, 1]} : vector<32x8xf32> to vector<16x8xf32>
    %59 = vector.extract_strided_slice %57 {offsets = [16, 0], sizes = [16, 8], strides = [1, 1]} : vector<32x8xf32> to vector<16x8xf32>
    %60 = arith.maximumf %58, %59 : vector<16x8xf32>
    %61 = arith.subf %58, %60 : vector<16x8xf32>
    %62 = math.exp %61 : vector<16x8xf32>
    %63 = arith.subf %59, %60 : vector<16x8xf32>
    %64 = math.exp %63 : vector<16x8xf32>
    %65 = arith.addf %62, %64 : vector<16x8xf32>
    %66 = tpu.reciprocal %65 {approx = true} : vector<16x8xf32> -> vector<16x8xf32>
    %67 = arith.mulf %62, %66 : vector<16x8xf32>
    %68 = arith.mulf %64, %66 : vector<16x8xf32>
    %69 = tpu.concatenate %67, %68 in 0 : vector<16x8xf32>, vector<16x8xf32> -> vector<32x8xf32>
    %70 = arith.truncf %69 : vector<32x8xf32> to vector<32x8xbf16>
    %cst_14 = arith.constant dense<0.000000e+00> : vector<32x32xf32>
    %71 = tpu.matmul %70, %34, %cst_14 {dimension_numbers = #tpu.dot_dimension_numbers<[1], [0], [0], [1], [0, 0, 1, 1], [], []>} : vector<32x8xbf16>, vector<8x32xbf16>, vector<32x32xf32> -> vector<32x32xf32>
    %72 = vector.extract_strided_slice %71 {offsets = [0, 0], sizes = [16, 32], strides = [1, 1]} : vector<32x32xf32> to vector<16x32xf32>
    %73 = vector.shape_cast %72 : vector<16x32xf32> to vector<2x8x32xf32>
    %74 = vector.extract_strided_slice %46 {offsets = [0, 0, 0], sizes = [1, 8, 32], strides = [1, 1, 1]} : vector<2x8x32xf32> to vector<1x8x32xf32>
    %75 = vector.broadcast %74 : vector<1x8x32xf32> to vector<2x8x32xf32>
    %76 = arith.mulf %73, %75 : vector<2x8x32xf32>
    %77 = vector.extract_strided_slice %71 {offsets = [16, 0], sizes = [16, 32], strides = [1, 1]} : vector<32x32xf32> to vector<16x32xf32>
    %78 = vector.shape_cast %77 : vector<16x32xf32> to vector<2x8x32xf32>
    %79 = vector.extract_strided_slice %46 {offsets = [1, 0, 0], sizes = [1, 8, 32], strides = [1, 1, 1]} : vector<2x8x32xf32> to vector<1x8x32xf32>
    %80 = vector.broadcast %79 : vector<1x8x32xf32> to vector<2x8x32xf32>
    %81 = arith.mulf %78, %80 : vector<2x8x32xf32>
    %82 = arith.addf %76, %81 : vector<2x8x32xf32>
    %83 = vector.shape_cast %82 : vector<2x8x32xf32> to vector<16x32xf32>
    %84 = arith.truncf %83 : vector<16x32xf32> to vector<16x32xbf16>
    %c384 = arith.constant 384 : index
    %c0_15 = arith.constant 0 : index
    %85 = vector.load %arg1[%c384, %c0_15] : memref<480x256xbf16, #tpu.memory_space<vmem>>, vector<32x32xbf16>
    %cst_16 = arith.constant dense<0.000000e+00> : vector<16x32xf32>
    %86 = tpu.matmul %84, %85, %cst_16 {dimension_numbers = #tpu.dot_dimension_numbers<[1], [0], [0], [1], [0, 0, 1, 1], [], []>} : vector<16x32xbf16>, vector<32x32xbf16>, vector<16x32xf32> -> vector<16x32xf32>
    %c1_17 = arith.constant 1 : index
    %c128_18 = arith.constant 128 : index
    %87 = vector.load %arg2[%c1_17, %c128_18] : memref<16x256xf32, #tpu.memory_space<vmem>>, vector<1x32xf32>
    %88 = vector.broadcast %87 : vector<1x32xf32> to vector<16x32xf32>
    %89 = arith.addf %86, %88 : vector<16x32xf32>
    %90 = arith.addf %32, %89 : vector<16x32xf32>
    %cst_19 = arith.constant dense<0.000000e+00> : vector<16xf32>
    %91 = vector.multi_reduction <add>, %90, %cst_19 [1] : vector<16x32xf32> to vector<16xf32>
    %92 = vector.shape_cast %91 : vector<16xf32> to vector<16x1xf32>
    %cst_20 = arith.constant 3.200000e+01 : f32
    %93 = vector.broadcast %cst_20 : f32 to vector<16x1xf32>
    %94 = arith.divf %92, %93 : vector<16x1xf32>
    %95 = vector.broadcast %94 : vector<16x1xf32> to vector<16x32xf32>
    %96 = arith.subf %90, %95 : vector<16x32xf32>
    %97 = arith.mulf %96, %96 : vector<16x32xf32>
    %cst_21 = arith.constant dense<0.000000e+00> : vector<16xf32>
    %98 = vector.multi_reduction <add>, %97, %cst_21 [1] : vector<16x32xf32> to vector<16xf32>
    %99 = vector.shape_cast %98 : vector<16xf32> to vector<16x1xf32>
    %cst_22 = arith.constant 3.200000e+01 : f32
    %100 = vector.broadcast %cst_22 : f32 to vector<16x1xf32>
    %101 = arith.divf %99, %100 : vector<16x1xf32>
    %cst_23 = arith.constant 9.99999974E-6 : f32
    %102 = vector.broadcast %cst_23 : f32 to vector<16x1xf32>
    %103 = arith.addf %101, %102 : vector<16x1xf32>
    %104 = math.rsqrt %103 : vector<16x1xf32>
    %105 = vector.broadcast %104 : vector<16x1xf32> to vector<16x32xf32>
    %106 = arith.mulf %96, %105 : vector<16x32xf32>
    %c2 = arith.constant 2 : index
    %c0_24 = arith.constant 0 : index
    %107 = vector.load %arg2[%c2, %c0_24] : memref<16x256xf32, #tpu.memory_space<vmem>>, vector<1x32xf32>
    %108 = vector.broadcast %107 : vector<1x32xf32> to vector<16x32xf32>
    %109 = arith.mulf %106, %108 : vector<16x32xf32>
    %c2_25 = arith.constant 2 : index
    %c128_26 = arith.constant 128 : index
    %110 = vector.load %arg2[%c2_25, %c128_26] : memref<16x256xf32, #tpu.memory_space<vmem>>, vector<1x32xf32>
    %111 = vector.broadcast %110 : vector<1x32xf32> to vector<16x32xf32>
    %112 = arith.addf %109, %111 : vector<16x32xf32>
    %113 = arith.truncf %112 : vector<16x32xf32> to vector<16x32xbf16>
    %c288 = arith.constant 288 : index
    %c0_27 = arith.constant 0 : index
    %114 = vector.load %arg1[%c288, %c0_27] : memref<480x256xbf16, #tpu.memory_space<vmem>>, vector<32x64xbf16>
    %cst_28 = arith.constant dense<0.000000e+00> : vector<16x64xf32>
    %115 = tpu.matmul %113, %114, %cst_28 {dimension_numbers = #tpu.dot_dimension_numbers<[1], [0], [0], [1], [0, 0, 1, 1], [], []>} : vector<16x32xbf16>, vector<32x64xbf16>, vector<16x64xf32> -> vector<16x64xf32>
    %c3 = arith.constant 3 : index
    %c0_29 = arith.constant 0 : index
    %116 = vector.load %arg2[%c3, %c0_29] : memref<16x256xf32, #tpu.memory_space<vmem>>, vector<1x64xf32>
    %117 = vector.broadcast %116 : vector<1x64xf32> to vector<16x64xf32>
    %118 = arith.addf %115, %117 : vector<16x64xf32>
    %cst_30 = arith.constant 0.000000e+00 : f32
    %119 = vector.broadcast %cst_30 : f32 to vector<16x64xf32>
    %120 = arith.maximumf %118, %119 : vector<16x64xf32>
    %121 = arith.truncf %120 : vector<16x64xf32> to vector<16x64xbf16>
    %c320 = arith.constant 320 : index
    %c0_31 = arith.constant 0 : index
    %122 = vector.load %arg1[%c320, %c0_31] : memref<480x256xbf16, #tpu.memory_space<vmem>>, vector<64x32xbf16>
    %cst_32 = arith.constant dense<0.000000e+00> : vector<16x32xf32>
    %123 = tpu.matmul %121, %122, %cst_32 {dimension_numbers = #tpu.dot_dimension_numbers<[1], [0], [0], [1], [0, 0, 1, 1], [], []>} : vector<16x64xbf16>, vector<64x32xbf16>, vector<16x32xf32> -> vector<16x32xf32>
    %c3_33 = arith.constant 3 : index
    %c128_34 = arith.constant 128 : index
    %124 = vector.load %arg2[%c3_33, %c128_34] : memref<16x256xf32, #tpu.memory_space<vmem>>, vector<1x32xf32>
    %125 = vector.broadcast %124 : vector<1x32xf32> to vector<16x32xf32>
    %126 = arith.addf %123, %125 : vector<16x32xf32>
    %127 = arith.addf %112, %126 : vector<16x32xf32>
    %cst_35 = arith.constant dense<0.000000e+00> : vector<16xf32>
    %128 = vector.multi_reduction <add>, %127, %cst_35 [1] : vector<16x32xf32> to vector<16xf32>
    %129 = vector.shape_cast %128 : vector<16xf32> to vector<16x1xf32>
    %cst_36 = arith.constant 3.200000e+01 : f32
    %130 = vector.broadcast %cst_36 : f32 to vector<16x1xf32>
    %131 = arith.divf %129, %130 : vector<16x1xf32>
    %132 = vector.broadcast %131 : vector<16x1xf32> to vector<16x32xf32>
    %133 = arith.subf %127, %132 : vector<16x32xf32>
    %134 = arith.mulf %133, %133 : vector<16x32xf32>
    %cst_37 = arith.constant dense<0.000000e+00> : vector<16xf32>
    %135 = vector.multi_reduction <add>, %134, %cst_37 [1] : vector<16x32xf32> to vector<16xf32>
    %136 = vector.shape_cast %135 : vector<16xf32> to vector<16x1xf32>
    %cst_38 = arith.constant 3.200000e+01 : f32
    %137 = vector.broadcast %cst_38 : f32 to vector<16x1xf32>
    %138 = arith.divf %136, %137 : vector<16x1xf32>
    %cst_39 = arith.constant 9.99999974E-6 : f32
    %139 = vector.broadcast %cst_39 : f32 to vector<16x1xf32>
    %140 = arith.addf %138, %139 : vector<16x1xf32>
    %141 = math.rsqrt %140 : vector<16x1xf32>
    %142 = vector.broadcast %141 : vector<16x1xf32> to vector<16x32xf32>
    %143 = arith.mulf %133, %142 : vector<16x32xf32>
    %c4 = arith.constant 4 : index
    %c0_40 = arith.constant 0 : index
    %144 = vector.load %arg2[%c4, %c0_40] : memref<16x256xf32, #tpu.memory_space<vmem>>, vector<1x32xf32>
    %145 = vector.broadcast %144 : vector<1x32xf32> to vector<16x32xf32>
    %146 = arith.mulf %143, %145 : vector<16x32xf32>
    %c4_41 = arith.constant 4 : index
    %c128_42 = arith.constant 128 : index
    %147 = vector.load %arg2[%c4_41, %c128_42] : memref<16x256xf32, #tpu.memory_space<vmem>>, vector<1x32xf32>
    %148 = vector.broadcast %147 : vector<1x32xf32> to vector<16x32xf32>
    %149 = arith.addf %146, %148 : vector<16x32xf32>
    %150 = arith.truncf %149 : vector<16x32xf32> to vector<16x32xbf16>
    %c256_43 = arith.constant 256 : index
    %c128_44 = arith.constant 128 : index
    %151 = vector.load %arg1[%c256_43, %c128_44] : memref<480x256xbf16, #tpu.memory_space<vmem>>, vector<32x96xbf16>
    %cst_45 = arith.constant dense<0.000000e+00> : vector<16x96xf32>
    %152 = tpu.matmul %150, %151, %cst_45 {dimension_numbers = #tpu.dot_dimension_numbers<[1], [0], [0], [1], [0, 0, 1, 1], [], []>} : vector<16x32xbf16>, vector<32x96xbf16>, vector<16x96xf32> -> vector<16x96xf32>
    %c5 = arith.constant 5 : index
    %c0_46 = arith.constant 0 : index
    %153 = vector.load %arg2[%c5, %c0_46] : memref<16x256xf32, #tpu.memory_space<vmem>>, vector<1x96xf32>
    %154 = vector.broadcast %153 : vector<1x96xf32> to vector<16x96xf32>
    %155 = arith.addf %152, %154 : vector<16x96xf32>
    %156 = vector.extract_strided_slice %155 {offsets = [0, 0], sizes = [16, 32], strides = [1, 1]} : vector<16x96xf32> to vector<16x32xf32>
    %157 = vector.shape_cast %156 : vector<16x32xf32> to vector<2x8x32xf32>
    %158 = vector.extract_strided_slice %155 {offsets = [0, 32], sizes = [16, 32], strides = [1, 1]} : vector<16x96xf32> to vector<16x32xf32>
    %159 = vector.shape_cast %158 : vector<16x32xf32> to vector<2x8x32xf32>
    %160 = vector.extract_strided_slice %155 {offsets = [0, 64], sizes = [16, 32], strides = [1, 1]} : vector<16x96xf32> to vector<16x32xf32>
    %161 = vector.shape_cast %160 : vector<16x32xf32> to vector<2x8x32xf32>
    %162 = vector.extract_strided_slice %159 {offsets = [0, 0, 0], sizes = [1, 8, 32], strides = [1, 1, 1]} : vector<2x8x32xf32> to vector<1x8x32xf32>
    %163 = vector.broadcast %162 : vector<1x8x32xf32> to vector<2x8x32xf32>
    %164 = arith.mulf %157, %163 : vector<2x8x32xf32>
    %165 = vector.shape_cast %164 : vector<2x8x32xf32> to vector<16x32xf32>
    %166 = vector.extract_strided_slice %159 {offsets = [1, 0, 0], sizes = [1, 8, 32], strides = [1, 1, 1]} : vector<2x8x32xf32> to vector<1x8x32xf32>
    %167 = vector.broadcast %166 : vector<1x8x32xf32> to vector<2x8x32xf32>
    %168 = arith.mulf %157, %167 : vector<2x8x32xf32>
    %169 = vector.shape_cast %168 : vector<2x8x32xf32> to vector<16x32xf32>
    %170 = tpu.concatenate %165, %169 in 0 : vector<16x32xf32>, vector<16x32xf32> -> vector<32x32xf32>
    %171 = arith.truncf %170 : vector<32x32xf32> to vector<32x32xbf16>
    %cst_47 = arith.constant dense<0.000000e+00> : vector<32x8xf32>
    %172 = tpu.matmul %171, %33, %cst_47 {dimension_numbers = #tpu.dot_dimension_numbers<[1], [0], [0], [1], [0, 0, 1, 1], [], []>} : vector<32x32xbf16>, vector<32x8xbf16>, vector<32x8xf32> -> vector<32x8xf32>
    %173 = vector.extract_strided_slice %172 {offsets = [0, 0], sizes = [16, 8], strides = [1, 1]} : vector<32x8xf32> to vector<16x8xf32>
    %174 = vector.extract_strided_slice %172 {offsets = [16, 0], sizes = [16, 8], strides = [1, 1]} : vector<32x8xf32> to vector<16x8xf32>
    %175 = arith.maximumf %173, %174 : vector<16x8xf32>
    %176 = arith.subf %173, %175 : vector<16x8xf32>
    %177 = math.exp %176 : vector<16x8xf32>
    %178 = arith.subf %174, %175 : vector<16x8xf32>
    %179 = math.exp %178 : vector<16x8xf32>
    %180 = arith.addf %177, %179 : vector<16x8xf32>
    %181 = tpu.reciprocal %180 {approx = true} : vector<16x8xf32> -> vector<16x8xf32>
    %182 = arith.mulf %177, %181 : vector<16x8xf32>
    %183 = arith.mulf %179, %181 : vector<16x8xf32>
    %184 = tpu.concatenate %182, %183 in 0 : vector<16x8xf32>, vector<16x8xf32> -> vector<32x8xf32>
    %185 = arith.truncf %184 : vector<32x8xf32> to vector<32x8xbf16>
    %cst_48 = arith.constant dense<0.000000e+00> : vector<32x32xf32>
    %186 = tpu.matmul %185, %34, %cst_48 {dimension_numbers = #tpu.dot_dimension_numbers<[1], [0], [0], [1], [0, 0, 1, 1], [], []>} : vector<32x8xbf16>, vector<8x32xbf16>, vector<32x32xf32> -> vector<32x32xf32>
    %187 = vector.extract_strided_slice %186 {offsets = [0, 0], sizes = [16, 32], strides = [1, 1]} : vector<32x32xf32> to vector<16x32xf32>
    %188 = vector.shape_cast %187 : vector<16x32xf32> to vector<2x8x32xf32>
    %189 = vector.extract_strided_slice %161 {offsets = [0, 0, 0], sizes = [1, 8, 32], strides = [1, 1, 1]} : vector<2x8x32xf32> to vector<1x8x32xf32>
    %190 = vector.broadcast %189 : vector<1x8x32xf32> to vector<2x8x32xf32>
    %191 = arith.mulf %188, %190 : vector<2x8x32xf32>
    %192 = vector.extract_strided_slice %186 {offsets = [16, 0], sizes = [16, 32], strides = [1, 1]} : vector<32x32xf32> to vector<16x32xf32>
    %193 = vector.shape_cast %192 : vector<16x32xf32> to vector<2x8x32xf32>
    %194 = vector.extract_strided_slice %161 {offsets = [1, 0, 0], sizes = [1, 8, 32], strides = [1, 1, 1]} : vector<2x8x32xf32> to vector<1x8x32xf32>
    %195 = vector.broadcast %194 : vector<1x8x32xf32> to vector<2x8x32xf32>
    %196 = arith.mulf %193, %195 : vector<2x8x32xf32>
    %197 = arith.addf %191, %196 : vector<2x8x32xf32>
    %198 = vector.shape_cast %197 : vector<2x8x32xf32> to vector<16x32xf32>
    %199 = arith.truncf %198 : vector<16x32xf32> to vector<16x32xbf16>
    %c384_49 = arith.constant 384 : index
    %c128_50 = arith.constant 128 : index
    %200 = vector.load %arg1[%c384_49, %c128_50] : memref<480x256xbf16, #tpu.memory_space<vmem>>, vector<32x32xbf16>
    %cst_51 = arith.constant dense<0.000000e+00> : vector<16x32xf32>
    %201 = tpu.matmul %199, %200, %cst_51 {dimension_numbers = #tpu.dot_dimension_numbers<[1], [0], [0], [1], [0, 0, 1, 1], [], []>} : vector<16x32xbf16>, vector<32x32xbf16>, vector<16x32xf32> -> vector<16x32xf32>
    %c5_52 = arith.constant 5 : index
    %c128_53 = arith.constant 128 : index
    %202 = vector.load %arg2[%c5_52, %c128_53] : memref<16x256xf32, #tpu.memory_space<vmem>>, vector<1x32xf32>
    %203 = vector.broadcast %202 : vector<1x32xf32> to vector<16x32xf32>
    %204 = arith.addf %201, %203 : vector<16x32xf32>
    %205 = arith.addf %149, %204 : vector<16x32xf32>
    %cst_54 = arith.constant dense<0.000000e+00> : vector<16xf32>
    %206 = vector.multi_reduction <add>, %205, %cst_54 [1] : vector<16x32xf32> to vector<16xf32>
    %207 = vector.shape_cast %206 : vector<16xf32> to vector<16x1xf32>
    %cst_55 = arith.constant 3.200000e+01 : f32
    %208 = vector.broadcast %cst_55 : f32 to vector<16x1xf32>
    %209 = arith.divf %207, %208 : vector<16x1xf32>
    %210 = vector.broadcast %209 : vector<16x1xf32> to vector<16x32xf32>
    %211 = arith.subf %205, %210 : vector<16x32xf32>
    %212 = arith.mulf %211, %211 : vector<16x32xf32>
    %cst_56 = arith.constant dense<0.000000e+00> : vector<16xf32>
    %213 = vector.multi_reduction <add>, %212, %cst_56 [1] : vector<16x32xf32> to vector<16xf32>
    %214 = vector.shape_cast %213 : vector<16xf32> to vector<16x1xf32>
    %cst_57 = arith.constant 3.200000e+01 : f32
    %215 = vector.broadcast %cst_57 : f32 to vector<16x1xf32>
    %216 = arith.divf %214, %215 : vector<16x1xf32>
    %cst_58 = arith.constant 9.99999974E-6 : f32
    %217 = vector.broadcast %cst_58 : f32 to vector<16x1xf32>
    %218 = arith.addf %216, %217 : vector<16x1xf32>
    %219 = math.rsqrt %218 : vector<16x1xf32>
    %220 = vector.broadcast %219 : vector<16x1xf32> to vector<16x32xf32>
    %221 = arith.mulf %211, %220 : vector<16x32xf32>
    %c6 = arith.constant 6 : index
    %c0_59 = arith.constant 0 : index
    %222 = vector.load %arg2[%c6, %c0_59] : memref<16x256xf32, #tpu.memory_space<vmem>>, vector<1x32xf32>
    %223 = vector.broadcast %222 : vector<1x32xf32> to vector<16x32xf32>
    %224 = arith.mulf %221, %223 : vector<16x32xf32>
    %c6_60 = arith.constant 6 : index
    %c128_61 = arith.constant 128 : index
    %225 = vector.load %arg2[%c6_60, %c128_61] : memref<16x256xf32, #tpu.memory_space<vmem>>, vector<1x32xf32>
    %226 = vector.broadcast %225 : vector<1x32xf32> to vector<16x32xf32>
    %227 = arith.addf %224, %226 : vector<16x32xf32>
    %228 = arith.truncf %227 : vector<16x32xf32> to vector<16x32xbf16>
    %c288_62 = arith.constant 288 : index
    %c128_63 = arith.constant 128 : index
    %229 = vector.load %arg1[%c288_62, %c128_63] : memref<480x256xbf16, #tpu.memory_space<vmem>>, vector<32x64xbf16>
    %cst_64 = arith.constant dense<0.000000e+00> : vector<16x64xf32>
    %230 = tpu.matmul %228, %229, %cst_64 {dimension_numbers = #tpu.dot_dimension_numbers<[1], [0], [0], [1], [0, 0, 1, 1], [], []>} : vector<16x32xbf16>, vector<32x64xbf16>, vector<16x64xf32> -> vector<16x64xf32>
    %c7 = arith.constant 7 : index
    %c0_65 = arith.constant 0 : index
    %231 = vector.load %arg2[%c7, %c0_65] : memref<16x256xf32, #tpu.memory_space<vmem>>, vector<1x64xf32>
    %232 = vector.broadcast %231 : vector<1x64xf32> to vector<16x64xf32>
    %233 = arith.addf %230, %232 : vector<16x64xf32>
    %cst_66 = arith.constant 0.000000e+00 : f32
    %234 = vector.broadcast %cst_66 : f32 to vector<16x64xf32>
    %235 = arith.maximumf %233, %234 : vector<16x64xf32>
    %236 = arith.truncf %235 : vector<16x64xf32> to vector<16x64xbf16>
    %c320_67 = arith.constant 320 : index
    %c128_68 = arith.constant 128 : index
    %237 = vector.load %arg1[%c320_67, %c128_68] : memref<480x256xbf16, #tpu.memory_space<vmem>>, vector<64x32xbf16>
    %cst_69 = arith.constant dense<0.000000e+00> : vector<16x32xf32>
    %238 = tpu.matmul %236, %237, %cst_69 {dimension_numbers = #tpu.dot_dimension_numbers<[1], [0], [0], [1], [0, 0, 1, 1], [], []>} : vector<16x64xbf16>, vector<64x32xbf16>, vector<16x32xf32> -> vector<16x32xf32>
    %c7_70 = arith.constant 7 : index
    %c128_71 = arith.constant 128 : index
    %239 = vector.load %arg2[%c7_70, %c128_71] : memref<16x256xf32, #tpu.memory_space<vmem>>, vector<1x32xf32>
    %240 = vector.broadcast %239 : vector<1x32xf32> to vector<16x32xf32>
    %241 = arith.addf %238, %240 : vector<16x32xf32>
    %242 = arith.addf %227, %241 : vector<16x32xf32>
    %cst_72 = arith.constant dense<0.000000e+00> : vector<16xf32>
    %243 = vector.multi_reduction <add>, %242, %cst_72 [1] : vector<16x32xf32> to vector<16xf32>
    %244 = vector.shape_cast %243 : vector<16xf32> to vector<16x1xf32>
    %cst_73 = arith.constant 3.200000e+01 : f32
    %245 = vector.broadcast %cst_73 : f32 to vector<16x1xf32>
    %246 = arith.divf %244, %245 : vector<16x1xf32>
    %247 = vector.broadcast %246 : vector<16x1xf32> to vector<16x32xf32>
    %248 = arith.subf %242, %247 : vector<16x32xf32>
    %249 = arith.mulf %248, %248 : vector<16x32xf32>
    %cst_74 = arith.constant dense<0.000000e+00> : vector<16xf32>
    %250 = vector.multi_reduction <add>, %249, %cst_74 [1] : vector<16x32xf32> to vector<16xf32>
    %251 = vector.shape_cast %250 : vector<16xf32> to vector<16x1xf32>
    %cst_75 = arith.constant 3.200000e+01 : f32
    %252 = vector.broadcast %cst_75 : f32 to vector<16x1xf32>
    %253 = arith.divf %251, %252 : vector<16x1xf32>
    %cst_76 = arith.constant 9.99999974E-6 : f32
    %254 = vector.broadcast %cst_76 : f32 to vector<16x1xf32>
    %255 = arith.addf %253, %254 : vector<16x1xf32>
    %256 = math.rsqrt %255 : vector<16x1xf32>
    %257 = vector.broadcast %256 : vector<16x1xf32> to vector<16x32xf32>
    %258 = arith.mulf %248, %257 : vector<16x32xf32>
    %c8 = arith.constant 8 : index
    %c0_77 = arith.constant 0 : index
    %259 = vector.load %arg2[%c8, %c0_77] : memref<16x256xf32, #tpu.memory_space<vmem>>, vector<1x32xf32>
    %260 = vector.broadcast %259 : vector<1x32xf32> to vector<16x32xf32>
    %261 = arith.mulf %258, %260 : vector<16x32xf32>
    %c8_78 = arith.constant 8 : index
    %c128_79 = arith.constant 128 : index
    %262 = vector.load %arg2[%c8_78, %c128_79] : memref<16x256xf32, #tpu.memory_space<vmem>>, vector<1x32xf32>
    %263 = vector.broadcast %262 : vector<1x32xf32> to vector<16x32xf32>
    %264 = arith.addf %261, %263 : vector<16x32xf32>
    %265 = arith.truncf %264 : vector<16x32xf32> to vector<16x32xbf16>
    %c416 = arith.constant 416 : index
    %c0_80 = arith.constant 0 : index
    %266 = vector.load %arg1[%c416, %c0_80] : memref<480x256xbf16, #tpu.memory_space<vmem>>, vector<32x32xbf16>
    %cst_81 = arith.constant dense<0.000000e+00> : vector<16x32xf32>
    %267 = tpu.matmul %265, %266, %cst_81 {dimension_numbers = #tpu.dot_dimension_numbers<[1], [0], [0], [1], [0, 0, 1, 1], [], []>} : vector<16x32xbf16>, vector<32x32xbf16>, vector<16x32xf32> -> vector<16x32xf32>
    %c9 = arith.constant 9 : index
    %c0_82 = arith.constant 0 : index
    %268 = vector.load %arg2[%c9, %c0_82] : memref<16x256xf32, #tpu.memory_space<vmem>>, vector<1x32xf32>
    %269 = vector.broadcast %268 : vector<1x32xf32> to vector<16x32xf32>
    %270 = arith.addf %267, %269 : vector<16x32xf32>
    %271 = math.tanh %270 : vector<16x32xf32>
    %272 = vector.shape_cast %264 : vector<16x32xf32> to vector<2x8x32xf32>
    %273 = vector.shape_cast %271 : vector<16x32xf32> to vector<2x8x32xf32>
    %c9_83 = arith.constant 9 : index
    %c128_84 = arith.constant 128 : index
    %274 = vector.load %arg2[%c9_83, %c128_84] : memref<16x256xf32, #tpu.memory_space<vmem>>, vector<1x32xf32>
    %275 = vector.shape_cast %274 : vector<1x32xf32> to vector<1x1x32xf32>
    %276 = vector.broadcast %275 : vector<1x1x32xf32> to vector<2x8x32xf32>
    %277 = arith.mulf %273, %276 : vector<2x8x32xf32>
    %cst_85 = arith.constant dense<0.000000e+00> : vector<2x8xf32>
    %278 = vector.multi_reduction <add>, %277, %cst_85 [2] : vector<2x8x32xf32> to vector<2x8xf32>
    %c10 = arith.constant 10 : index
    %c0_86 = arith.constant 0 : index
    %279 = vector.load %arg2[%c10, %c0_86] : memref<16x256xf32, #tpu.memory_space<vmem>>, vector<1x1xf32>
    %280 = vector.broadcast %279 : vector<1x1xf32> to vector<2x8xf32>
    %281 = arith.addf %278, %280 : vector<2x8xf32>
    %cst_87 = arith.constant dense<0xFF800000> : vector<2xf32>
    %282 = vector.multi_reduction <maximumf>, %281, %cst_87 [1] : vector<2x8xf32> to vector<2xf32>
    %283 = vector.shape_cast %282 : vector<2xf32> to vector<2x1xf32>
    %284 = vector.broadcast %283 : vector<2x1xf32> to vector<2x8xf32>
    %285 = arith.subf %281, %284 : vector<2x8xf32>
    %286 = math.exp %285 : vector<2x8xf32>
    %cst_88 = arith.constant dense<0.000000e+00> : vector<2xf32>
    %287 = vector.multi_reduction <add>, %286, %cst_88 [1] : vector<2x8xf32> to vector<2xf32>
    %288 = vector.shape_cast %287 : vector<2xf32> to vector<2x1xf32>
    %289 = vector.broadcast %288 : vector<2x1xf32> to vector<2x8xf32>
    %290 = arith.divf %286, %289 : vector<2x8xf32>
    %291 = vector.shape_cast %290 : vector<2x8xf32> to vector<2x8x1xf32>
    %292 = vector.broadcast %291 : vector<2x8x1xf32> to vector<2x8x32xf32>
    %293 = arith.mulf %292, %272 : vector<2x8x32xf32>
    %cst_89 = arith.constant dense<0.000000e+00> : vector<2x32xf32>
    %294 = vector.multi_reduction <add>, %293, %cst_89 [1] : vector<2x8x32xf32> to vector<2x32xf32>
    %295 = arith.truncf %294 : vector<2x32xf32> to vector<2x32xbf16>
    %c416_90 = arith.constant 416 : index
    %c128_91 = arith.constant 128 : index
    %296 = vector.load %arg1[%c416_90, %c128_91] : memref<480x256xbf16, #tpu.memory_space<vmem>>, vector<32x4xbf16>
    %cst_92 = arith.constant dense<0.000000e+00> : vector<2x4xf32>
    %297 = tpu.matmul %295, %296, %cst_92 {dimension_numbers = #tpu.dot_dimension_numbers<[1], [0], [0], [1], [0, 0, 1, 1], [], []>} : vector<2x32xbf16>, vector<32x4xbf16>, vector<2x4xf32> -> vector<2x4xf32>
    %c10_93 = arith.constant 10 : index
    %c128_94 = arith.constant 128 : index
    %298 = vector.load %arg2[%c10_93, %c128_94] : memref<16x256xf32, #tpu.memory_space<vmem>>, vector<1x4xf32>
    %299 = vector.broadcast %298 : vector<1x4xf32> to vector<2x4xf32>
    %300 = arith.addf %297, %299 : vector<2x4xf32>
    %301 = tpu.concatenate %300, %290 in 1 : vector<2x4xf32>, vector<2x8xf32> -> vector<2x12xf32>
    %c0_95 = arith.constant 0 : index
    %c0_96 = arith.constant 0 : index
    %302 = vector.load %arg3[%c0_95, %c0_96] : memref<2x12xf32, #tpu.memory_space<vmem>>, vector<2x12xf32>
    tpu.vector_store %arg3[%c0_95, %c0_96], %301 {strides = array<i32>} : memref<2x12xf32, #tpu.memory_space<vmem>>, vector<2x12xf32>,
    return
  }
}

</mosaic_0001>

<llo_original>
// kernel: genomic_transformer_forward.1
$region0: #{genomic_transformer_forward.1}
  #allocation0 [shape = 'u32[]', space=smem, size = 0x4, offset = 0x4, fixed_abs, tag = 'smem constant byte address 0x4 - core index']
  #allocation1 [shape = 'u32[144,128]{1,0:T(1,128)}', space=vmem, size = 0x12000, scoped, tag = 'internal scratch']
  %s0 = inlined_call_operand.hbm [shape: f32[2,256], index: 0, kind: input, shape index: {}]
  %s1 = inlined_call_operand.hbm [shape: bf16[480,256], index: 1, kind: input, shape index: {}]
  %s2 = inlined_call_operand.hbm [shape: f32[16,256], index: 2, kind: input, shape index: {}]
  %s3 = inlined_call_operand.vmem [shape: f32[2,12], index: 3, kind: output, shape index: {}]
  %s4 = sld [smem:[#allocation0]]
  $region34: #{genomic_transformer_forward.1} parent=0
    _
  %s6 = ssub.s32 1, %s4
  %s7 = scalar_select 0, %s6, %s4
  $region1: #{genomic_transformer_forward.1} parent=0
    #allocation2 [shape = 'u8[2048]{0}', space=vmem, size = 0x800, scoped, tag = 'input window, operand 0, single buffered']
    #allocation3 [shape = 's32[1]{0}', space=sflag, size = 0x4, scoped, tag = 'scoped memory for genomic_transformer_forward.1']
    #allocation4 [shape = 'u8[245760]{0}', space=vmem, size = 0x3c000, scoped, tag = 'input window, operand 1, single buffered']
    #allocation5 [shape = 's32[1]{0}', space=sflag, size = 0x4, scoped, tag = 'scoped memory for genomic_transformer_forward.1']
    #allocation6 [shape = 'u8[16384]{0}', space=vmem, size = 0x4000, scoped, tag = 'input window, operand 2, single buffered']
    %8 = vsyncpa [#allocation3], 0
    %9 = vsyncpa [#allocation5], 0
    // Predicated region
    $region2: #{genomic_transformer_forward.1} parent=1 // pred_check
      _
    $region3: #{genomic_transformer_forward.1} parent=1 // pred_check_branch
      %11 = sbr.rel (0) target = $region5
    $region4: #{genomic_transformer_forward.1} parent=1 // pred_region
      %s13 = ssub.s32 64, 64
      %14 = vsyncadd [#allocation3], %s13
      %s16 = sshll.u32 [#allocation2], 4
      %s17 = int_to_ptr.vmem [resolvable:$true] %s16
      %19 = dma.hbm_to_vmem [thread:$0]  %s0, 64, %s17, [#allocation3]
    $region5: #{genomic_transformer_forward.1} parent=1 // pred_fallthru
      _
    // Predicated region
    $region6: #{genomic_transformer_forward.1} parent=1 // pred_check
      _
    $region7: #{genomic_transformer_forward.1} parent=1 // pred_check_branch
      %21 = sbr.rel (0) target = $region9
    $region8: #{genomic_transformer_forward.1} parent=1 // pred_region
      %s23 = ssub.s32 7680, 7680
      %24 = vsyncadd [#allocation5], %s23
      %s25 = sshll.u32 [#allocation4], 4
      %s26 = int_to_ptr.vmem [resolvable:$true] %s25
      %31 = dma.hbm_to_vmem [thread:$0]  %s1, 7680, %s26, [#allocation5], 128, 128, 8
    $region9: #{genomic_transformer_forward.1} parent=1 // pred_fallthru
      _
    // Predicated region
    $region10: #{genomic_transformer_forward.1} parent=1 // pred_check
      _
    $region11: #{genomic_transformer_forward.1} parent=1 // pred_check_branch
      %33 = sbr.rel (0) target = $region13
    $region12: #{genomic_transformer_forward.1} parent=1 // pred_region
      %s35 = ssub.s32 512, 512
      %36 = vsyncadd [#allocation5], %s35
      %s37 = sshll.u32 [#allocation6], 4
      %s38 = int_to_ptr.vmem [resolvable:$true] %s37
      %43 = dma.hbm_to_vmem [thread:$0]  %s2, 512, %s38, [#allocation5], 256, 256, 16
    $region13: #{genomic_transformer_forward.1} parent=1 // pred_fallthru
      _
    // Predicated region
    $region14: #{genomic_transformer_forward.1} parent=1 // pred_check
      _
    $region15: #{genomic_transformer_forward.1} parent=1 // pred_check_branch
      %45 = sbr.rel (0) target = $region17
    $region16: #{genomic_transformer_forward.1} parent=1 // pred_region
      %46 = dma.done [#allocation3], 64
    $region17: #{genomic_transformer_forward.1} parent=1 // pred_fallthru
      _
    // Predicated region
    $region18: #{genomic_transformer_forward.1} parent=1 // pred_check
      _
    $region19: #{genomic_transformer_forward.1} parent=1 // pred_check_branch
      %48 = sbr.rel (0) target = $region21
    $region20: #{genomic_transformer_forward.1} parent=1 // pred_region
      %49 = dma.done [#allocation5], 7680
    $region21: #{genomic_transformer_forward.1} parent=1 // pred_fallthru
      _
    // Predicated region
    $region22: #{genomic_transformer_forward.1} parent=1 // pred_check
      _
    $region23: #{genomic_transformer_forward.1} parent=1 // pred_check_branch
      %51 = sbr.rel (0) target = $region25
    $region24: #{genomic_transformer_forward.1} parent=1 // pred_region
      %52 = dma.done [#allocation5], 512
    $region25: #{genomic_transformer_forward.1} parent=1 // pred_fallthru
      _
    %v54 = vld [vmem:[#allocation2] sm:$0xf]
    %v57 = vunpack.c.l.s4 1983009808
    %v58 = vunpack.c.0.s8 %v57
    %v59 = vlaneseq
    %v60 = vshrl.u32 %v59, 7
    %v61 = vsub.s32 %v58, %v60
    %v62 = vrot.slane %v54, %v61
    %v63 = vcombine.high %v62, %v62
    %v66 = vpack.c.bf16 %v62, %v62
    %v67 = vpack.c.bf16 %v63, %v63
    %v68 = vld [vmem:[#allocation4] sm:$0xff]
    %v69 = vld [vmem:[#allocation4 + $0x8] sm:$0xff]
    %v70 = vld [vmem:[#allocation4 + $0x10] sm:$0xff]
    %v71 = vld [vmem:[#allocation4 + $0x18] sm:$0xff]
    %v72 = vld [vmem:[#allocation4 + $0x20] sm:$0xff]
    %v73 = vld [vmem:[#allocation4 + $0x28] sm:$0xff]
    %v74 = vld [vmem:[#allocation4 + $0x30] sm:$0xff]
    %v75 = vld [vmem:[#allocation4 + $0x38] sm:$0xff]
    %v76 = vld [vmem:[#allocation4 + $0x40] sm:$0xff]
    %v77 = vld [vmem:[#allocation4 + $0x48] sm:$0xff]
    %v78 = vld [vmem:[#allocation4 + $0x50] sm:$0xff]
    %v79 = vld [vmem:[#allocation4 + $0x58] sm:$0xff]
    %v80 = vld [vmem:[#allocation4 + $0x60] sm:$0xff]
    %v81 = vld [vmem:[#allocation4 + $0x68] sm:$0xff]
    %v82 = vld [vmem:[#allocation4 + $0x70] sm:$0xff]
    %v83 = vld [vmem:[#allocation4 + $0x78] sm:$0xff]
    %v84 = vld [vmem:[#allocation4 + $0x80] sm:$0xff]
    %v85 = vld [vmem:[#allocation4 + $0x88] sm:$0xff]
    %v86 = vld [vmem:[#allocation4 + $0x90] sm:$0xff]
    %v87 = vld [vmem:[#allocation4 + $0x98] sm:$0xff]
    %v88 = vld [vmem:[#allocation4 + $0xa0] sm:$0xff]
    %v89 = vld [vmem:[#allocation4 + $0xa8] sm:$0xff]
    %v90 = vld [vmem:[#allocation4 + $0xb0] sm:$0xff]
    %v91 = vld [vmem:[#allocation4 + $0xb8] sm:$0xff]
    %v92 = vld [vmem:[#allocation4 + $0xc0] sm:$0xff]
    %v93 = vld [vmem:[#allocation4 + $0xc8] sm:$0xff]
    %v94 = vld [vmem:[#allocation4 + $0xd0] sm:$0xff]
    %v95 = vld [vmem:[#allocation4 + $0xd8] sm:$0xff]
    %v96 = vld [vmem:[#allocation4 + $0xe0] sm:$0xff]
    %v97 = vld [vmem:[#allocation4 + $0xe8] sm:$0xff]
    %v98 = vld [vmem:[#allocation4 + $0xf0] sm:$0xff]
    %v99 = vld [vmem:[#allocation4 + $0xf8] sm:$0xff]
    %v100 = vld [vmem:[#allocation6] ss:$8 sm:$0x3]
    %v102 = vlaneseq
    %v103 = vshrl.u32 %v102, 7
    %v104 = vsub.s32 0, %v103
    %v105 = vrot.slane %v100, %v104
    %v106 = vlaneseq
    %v107 = vshrl.u32 %v106, 7
    %v108 = vsub.s32 1, %v107
    %v109 = vrot.slane %v100, %v108
    %v144 = vunpack.c.l.b16 %v68
    %v145 = vunpack.c.h.b16 %v68
    %v146 = vunpack.c.l.b16 %v69
    %v147 = vunpack.c.h.b16 %v69
    %v148 = vunpack.c.l.b16 %v70
    %v149 = vunpack.c.h.b16 %v70
    %v150 = vunpack.c.l.b16 %v71
    %v151 = vunpack.c.h.b16 %v71
    %v152 = vunpack.c.l.b16 %v72
    %v153 = vunpack.c.h.b16 %v72
    %v154 = vunpack.c.l.b16 %v73
    %v155 = vunpack.c.h.b16 %v73
    %v156 = vunpack.c.l.b16 %v74
    %v157 = vunpack.c.h.b16 %v74
    %v158 = vunpack.c.l.b16 %v75
    %v159 = vunpack.c.h.b16 %v75
    %v160 = vunpack.c.l.b16 %v76
    %v161 = vunpack.c.h.b16 %v76
    %v162 = vunpack.c.l.b16 %v77
    %v163 = vunpack.c.h.b16 %v77
    %v164 = vunpack.c.l.b16 %v78
    %v165 = vunpack.c.h.b16 %v78
    %v166 = vunpack.c.l.b16 %v79
    %v167 = vunpack.c.h.b16 %v79
    %v168 = vunpack.c.l.b16 %v80
    %v169 = vunpack.c.h.b16 %v80
    %v170 = vunpack.c.l.b16 %v81
    %v171 = vunpack.c.h.b16 %v81
    %v172 = vunpack.c.l.b16 %v82
    %v173 = vunpack.c.h.b16 %v82
    %v174 = vunpack.c.l.b16 %v83
    %v175 = vunpack.c.h.b16 %v83
    %v176 = vunpack.c.l.b16 %v84
    %v177 = vunpack.c.h.b16 %v84
    %v178 = vunpack.c.l.b16 %v85
    %v179 = vunpack.c.h.b16 %v85
    %v180 = vunpack.c.l.b16 %v86
    %v181 = vunpack.c.h.b16 %v86
    %v182 = vunpack.c.l.b16 %v87
    %v183 = vunpack.c.h.b16 %v87
    %v184 = vunpack.c.l.b16 %v88
    %v185 = vunpack.c.h.b16 %v88
    %v186 = vunpack.c.l.b16 %v89
    %v187 = vunpack.c.h.b16 %v89
    %v188 = vunpack.c.l.b16 %v90
    %v189 = vunpack.c.h.b16 %v90
    %v190 = vunpack.c.l.b16 %v91
    %v191 = vunpack.c.h.b16 %v91
    %v192 = vunpack.c.l.b16 %v92
    %v193 = vunpack.c.h.b16 %v92
    %v194 = vunpack.c.l.b16 %v93
    %v195 = vunpack.c.h.b16 %v93
    %v196 = vunpack.c.l.b16 %v94
    %v197 = vunpack.c.h.b16 %v94
    %v198 = vunpack.c.l.b16 %v95
    %v199 = vunpack.c.h.b16 %v95
    %v200 = vunpack.c.l.b16 %v96
    %v201 = vunpack.c.h.b16 %v96
    %v202 = vunpack.c.l.b16 %v97
    %v203 = vunpack.c.h.b16 %v97
    %v204 = vunpack.c.l.b16 %v98
    %v205 = vunpack.c.h.b16 %v98
    %v206 = vunpack.c.l.b16 %v99
    %v207 = vunpack.c.h.b16 %v99
    %v208 = vpack.c.b16 %v146, %v144
    %v209 = vpack.c.b16 %v147, %v145
    %v210 = vpack.c.b16 %v150, %v148
    %v211 = vpack.c.b16 %v151, %v149
    %v212 = vpack.c.b16 %v154, %v152
    %v213 = vpack.c.b16 %v155, %v153
    %v214 = vpack.c.b16 %v158, %v156
    %v215 = vpack.c.b16 %v159, %v157
    %v216 = vpack.c.b16 %v162, %v160
    %v217 = vpack.c.b16 %v163, %v161
    %v218 = vpack.c.b16 %v166, %v164
    %v219 = vpack.c.b16 %v167, %v165
    %v220 = vpack.c.b16 %v170, %v168
    %v221 = vpack.c.b16 %v171, %v169
    %v222 = vpack.c.b16 %v174, %v172
    %v223 = vpack.c.b16 %v175, %v173
    %v224 = vpack.c.b16 %v178, %v176
    %v225 = vpack.c.b16 %v179, %v177
    %v226 = vpack.c.b16 %v182, %v180
    %v227 = vpack.c.b16 %v183, %v181
    %v228 = vpack.c.b16 %v186, %v184
    %v229 = vpack.c.b16 %v187, %v185
    %v230 = vpack.c.b16 %v190, %v188
    %v231 = vpack.c.b16 %v191, %v189
    %v232 = vpack.c.b16 %v194, %v192
    %v233 = vpack.c.b16 %v195, %v193
    %v234 = vpack.c.b16 %v198, %v196
    %v235 = vpack.c.b16 %v199, %v197
    %v236 = vpack.c.b16 %v202, %v200
    %v237 = vpack.c.b16 %v203, %v201
    %v238 = vpack.c.b16 %v206, %v204
    %v239 = vpack.c.b16 %v207, %v205
    %272 = vmatprep.subr.bf16.mxu0 %v209
    %273 = vmatpush1.bf16.msra.mxu0 %v208
    %274 = vmatprep.subr.bf16.mxu0 %v211
    %275 = vmatpush1.bf16.msra.mxu0 %v210
    %276 = vmatprep.subr.bf16.mxu0 %v213
    %277 = vmatpush1.bf16.msra.mxu0 %v212
    %278 = vmatprep.subr.bf16.mxu0 %v215
    %279 = vmatpush1.bf16.msra.mxu0 %v214
    %280 = vmatprep.subr.bf16.mxu0 %v217
    %281 = vmatpush1.bf16.msra.mxu0 %v216
    %282 = vmatprep.subr.bf16.mxu0 %v219
    %283 = vmatpush1.bf16.msra.mxu0 %v218
    %284 = vmatprep.subr.bf16.mxu0 %v221
    %285 = vmatpush1.bf16.msra.mxu0 %v220
    %286 = vmatprep.subr.bf16.mxu0 %v223
    %287 = vmatpush1.bf16.msra.mxu0 %v222
    %288 = vmatprep.subr.bf16.mxu0 %v225
    %289 = vmatpush1.bf16.msra.mxu0 %v224
    %290 = vmatprep.subr.bf16.mxu0 %v227
    %291 = vmatpush1.bf16.msra.mxu0 %v226
    %292 = vmatprep.subr.bf16.mxu0 %v229
    %293 = vmatpush1.bf16.msra.mxu0 %v228
    %294 = vmatprep.subr.bf16.mxu0 %v231
    %295 = vmatpush1.bf16.msra.mxu0 %v230
    %296 = vmatprep.subr.bf16.mxu0 %v233
    %297 = vmatpush1.bf16.msra.mxu0 %v232
    %298 = vmatprep.subr.bf16.mxu0 %v235
    %299 = vmatpush1.bf16.msra.mxu0 %v234
    %300 = vmatprep.subr.bf16.mxu0 %v237
    %301 = vmatpush1.bf16.msra.mxu0 %v236
    %302 = vmatprep.subr.bf16.mxu0 %v239
    %303 = vmatpush1.bf16.msra.mxu0 %v238
    %304 = vmatprep.mubr.bf16.mxu0 %v67
    %305 = vmatmul.mubr.bf16.gmra.mrb[0].mxu0 %v66
    %v306 = vpop.f32.mrb[0].mxu0
    %v307 = vadd.f32 %v105, %v306
    %v308 = vpop.f32.mrb[0].mxu0
    %v309 = vadd.f32 %v109, %v308
    %v310 = vpop.f32.mrb[0].mxu0
    %v311 = vpop.f32.mrb[0].mxu0
    %312 = vdwg.mxu0
    %vm313 = vcmp.gt.f32.partialorder %v307, 0.0
    %vm314 = vcmp.gt.f32.partialorder %v309, 0.0
    %v315 = vmin.f32 %v307, 0.0
    %v316 = vmin.f32 %v309, 0.0
    %v317 = vmul.f32 %v315, 1.442695
    %v318 = vpow.pop %v317
    %v319 = vmul.f32 %v316, 1.442695
    %v320 = vpow.pop %v319
    %v321 = vsub.f32 %v318, 1.0
    %v322 = vsub.f32 %v320, 1.0
    %v323 = vsel %vm313, %v307, %v321
    %v324 = vsel %vm314, %v309, %v322
    %v327 = vunpack.c.l.s4 1966171168
    %v328 = vunpack.c.0.s8 %v327
    %v329 = vlaneseq
    %v330 = vshrl.u32 %v329, 7
    %v331 = vsub.s32 %v328, %v330
    %v332 = vrot.slane %v323, %v331
    %v333 = vcombine.high %v332, %v332
    %v335 = vunpack.c.l.s4 1966171168
    %v336 = vunpack.c.0.s8 %v335
    %v337 = vlaneseq
    %v338 = vshrl.u32 %v337, 7
    %v339 = vsub.s32 %v336, %v338
    %v340 = vrot.slane %v332, %v339
    %v342 = vunpack.c.l.s4 1966171168
    %v343 = vunpack.c.0.s8 %v342
    %v344 = vlaneseq
    %v345 = vshrl.u32 %v344, 7
    %v346 = vsub.s32 %v343, %v345
    %v347 = vrot.slane %v333, %v346
    %v352 = vunpack.c.l.s4 1966171168
    %v353 = vunpack.c.0.s8 %v352
    %v354 = vlaneseq
    %v355 = vshrl.u32 %v354, 7
    %v356 = vsub.s32 %v353, %v355
    %v357 = vrot.slane %v324, %v356
    %v358 = vcombine.high %v357, %v357
    %v360 = vunpack.c.l.s4 1966171168
    %v361 = vunpack.c.0.s8 %v360
    %v362 = vlaneseq
    %v363 = vshrl.u32 %v362, 7
    %v364 = vsub.s32 %v361, %v363
    %v365 = vrot.slane %v357, %v364
    %v367 = vunpack.c.l.s4 1966171168
    %v368 = vunpack.c.0.s8 %v367
    %v369 = vlaneseq
    %v370 = vshrl.u32 %v369, 7
    %v371 = vsub.s32 %v368, %v370
    %v372 = vrot.slane %v358, %v371
    %v373 = vlaneseq
    %v374 = vshrl.u32 %v373, 7
    %v375 = vsub.s32 0, %v374
    %v376 = vrot.slane %v340, %v375
    %v377 = vlaneseq
    %v378 = vshrl.u32 %v377, 7
    %v379 = vsub.s32 0, %v378
    %v380 = vrot.slane %v347, %v379
    %381 = vrot.lane.b32.xlu0 %v376, 96
    %v382 = vpop.permute.xlu0 %381
    %383 = vrot.lane.b32.xlu0 %v380, 96
    %v384 = vpop.permute.xlu0 %383
    %387 = vrot.lane.b32.xlu0 %v376, 64
    %v388 = vpop.permute.xlu0 %387
    %389 = vrot.lane.b32.xlu0 %v380, 64
    %v390 = vpop.permute.xlu0 %389
    %393 = vrot.lane.b32.xlu0 %v376, 32
    %v394 = vpop.permute.xlu0 %393
    %395 = vrot.lane.b32.xlu0 %v380, 32
    %v396 = vpop.permute.xlu0 %395
    %v399 = vlaneseq
    %v400 = vshrl.u32 %v399, 7
    %v401 = vsub.s32 0, %v400
    %v402 = vrot.slane %v365, %v401
    %v403 = vlaneseq
    %v404 = vshrl.u32 %v403, 7
    %v405 = vsub.s32 0, %v404
    %v406 = vrot.slane %v372, %v405
    %409 = vrot.lane.b32.xlu0 %v402, 96
    %v410 = vpop.permute.xlu0 %409
    %411 = vrot.lane.b32.xlu0 %v406, 96
    %v412 = vpop.permute.xlu0 %411
    %415 = vrot.lane.b32.xlu0 %v402, 64
    %v416 = vpop.permute.xlu0 %415
    %417 = vrot.lane.b32.xlu0 %v406, 64
    %v418 = vpop.permute.xlu0 %417
    %421 = vrot.lane.b32.xlu0 %v402, 32
    %v422 = vpop.permute.xlu0 %421
    %423 = vrot.lane.b32.xlu0 %v406, 32
    %v424 = vpop.permute.xlu0 %423
    %vm427 = vcmask 1040384
    %v428 = vsel %vm427, %v340, %v382
    %v429 = vsel %vm427, %v347, %v384
    %vm430 = vcmask 1041408
    %v431 = vsel %vm430, %v428, %v388
    %v432 = vsel %vm430, %v429, %v390
    %vm433 = vcmask 1042432
    %v434 = vsel %vm433, %v431, %v394
    %v435 = vsel %vm433, %v432, %v396
    %vm436 = vcmask 1043456
    %v437 = vsel %vm436, %v434, %v402
    %v438 = vsel %vm436, %v435, %v406
    %vm439 = vcmask 1044480
    %v440 = vsel %vm439, %v437, %v410
    %v441 = vsel %vm439, %v438, %v412
    %vm442 = vcmask 1045504
    %v443 = vsel %vm442, %v440, %v416
    %v444 = vsel %vm442, %v441, %v418
    %vm445 = vcmask 1046528
    %v446 = vsel %vm445, %v443, %v422
    %v447 = vsel %vm445, %v444, %v424
    %v448 = vld [vmem:[#allocation4 + $0x1c0] sm:$0xf]
    %v449 = vld [vmem:[#allocation4 + $0x1c8] sm:$0xf]
    %v450 = vld [vmem:[#allocation4 + $0x1d0] sm:$0xf]
    %v451 = vld [vmem:[#allocation4 + $0x1d8] sm:$0xf]
    %v452 = vld [vmem:[#allocation4 + $0x1c4] sm:$0xf]
    %v453 = vpack.c.bf16 %v447, %v446
    %v454 = vld [vmem:[#allocation4 + $0x100] sm:$0xf]
    %v455 = vld [vmem:[#allocation4 + $0x108] sm:$0xf]
    %v456 = vld [vmem:[#allocation4 + $0x110] sm:$0xf]
    %v457 = vld [vmem:[#allocation4 + $0x118] sm:$0xf]
    %v458 = vld [vmem:[#allocation6 + $0x1] ss:$0 sm:$0xff]
    %v463 = vunpack.c.l.b16 %v454
    %v464 = vunpack.c.l.b16 %v455
    %v465 = vunpack.c.l.b16 %v456
    %v466 = vunpack.c.l.b16 %v457
    %v467 = vpack.c.b16 %v464, %v463
    %v468 = vpack.c.b16 %v466, %v465
    %vm471 = vcmask 261120
    %v473 = vsel %vm471, %v453, 0
    %475 = vmatprep.subr.bf16.mxu0 0
    %476 = vmatpush1.bf16.msra.mxu0 %v467
    %477 = vmatprep.subr.bf16.mxu0 0
    %478 = vmatpush1.bf16.msra.mxu0 %v468
    %479 = vmatprep.subr.bf16.mxu0 0
    %480 = vmatpush1.bf16.msra.mxu0 0
    %481 = vmatprep.subr.bf16.mxu0 0
    %482 = vmatpush1.bf16.msra.mxu0 0
    %483 = vmatprep.subr.bf16.mxu0 0
    %484 = vmatpush1.bf16.msra.mxu0 0
    %485 = vmatprep.subr.bf16.mxu0 0
    %486 = vmatpush1.bf16.msra.mxu0 0
    %487 = vmatprep.subr.bf16.mxu0 0
    %488 = vmatpush1.bf16.msra.mxu0 0
    %489 = vmatprep.subr.bf16.mxu0 0
    %490 = vmatpush1.bf16.msra.mxu0 0
    %491 = vmatprep.subr.bf16.mxu0 0
    %492 = vmatpush1.bf16.msra.mxu0 0
    %493 = vmatprep.subr.bf16.mxu0 0
    %494 = vmatpush1.bf16.msra.mxu0 0
    %495 = vmatprep.subr.bf16.mxu0 0
    %496 = vmatpush1.bf16.msra.mxu0 0
    %497 = vmatprep.subr.bf16.mxu0 0
    %498 = vmatpush1.bf16.msra.mxu0 0
    %499 = vmatprep.subr.bf16.mxu0 0
    %500 = vmatpush1.bf16.msra.mxu0 0
    %501 = vmatprep.subr.bf16.mxu0 0
    %502 = vmatpush1.bf16.msra.mxu0 0
    %503 = vmatprep.subr.bf16.mxu0 0
    %504 = vmatpush1.bf16.msra.mxu0 0
    %505 = vmatprep.subr.bf16.mxu0 0
    %506 = vmatpush1.bf16.msra.mxu0 0
    %507 = vmatprep.mubr.bf16.mxu0 0
    %508 = vmatmul.mubr.bf16.gmra.mrb[0].mxu0 %v473
    %v509 = vpop.f32.mrb[0].mxu0
    %v510 = vadd.f32 %v458, %v509
    %v511 = vpop.f32.mrb[0].mxu0
    %v512 = vpop.f32.mrb[0].mxu0
    %v513 = vadd.f32 %v458, %v512
    %v514 = vpop.f32.mrb[0].mxu0
    %515 = vdwg.mxu0
    %517 = vrot.lane.b32.xlu0 %v510, 96
    %v518 = vpop.permute.xlu0 %517
    %v520 = vmul.f32 %v510, %v518
    %v521 = vmul.f32 %v513, %v518
    %523 = vrot.lane.b32.xlu0 %v513, 96
    %v524 = vpop.permute.xlu0 %523
    %v526 = vmul.f32 %v510, %v524
    %v527 = vmul.f32 %v513, %v524
    %v528 = vpack.c.bf16 %v521, %v520
    %v529 = vpack.c.bf16 %v527, %v526
    %v534 = vunpack.c.l.b16 %v448
    %v535 = vunpack.c.l.b16 %v449
    %v536 = vunpack.c.l.b16 %v450
    %v537 = vunpack.c.l.b16 %v451
    %v538 = vpack.c.b16 %v535, %v534
    %v539 = vpack.c.b16 %v537, %v536
    %v543 = vsel %vm471, %v528, 0
    %v546 = vsel %vm471, %v529, 0
    %548 = vmatprep.subr.bf16.mxu0 0
    %549 = vmatpush1.bf16.msra.mxu0 %v538
    %550 = vmatprep.subr.bf16.mxu0 0
    %551 = vmatpush1.bf16.msra.mxu0 %v539
    %552 = vmatprep.subr.bf16.mxu0 0
    %553 = vmatpush1.bf16.msra.mxu0 0
    %554 = vmatprep.subr.bf16.mxu0 0
    %555 = vmatpush1.bf16.msra.mxu0 0
    %556 = vmatprep.subr.bf16.mxu0 0
    %557 = vmatpush1.bf16.msra.mxu0 0
    %558 = vmatprep.subr.bf16.mxu0 0
    %559 = vmatpush1.bf16.msra.mxu0 0
    %560 = vmatprep.subr.bf16.mxu0 0
    %561 = vmatpush1.bf16.msra.mxu0 0
    %562 = vmatprep.subr.bf16.mxu0 0
    %563 = vmatpush1.bf16.msra.mxu0 0
    %564 = vmatprep.subr.bf16.mxu0 0
    %565 = vmatpush1.bf16.msra.mxu0 0
    %566 = vmatprep.subr.bf16.mxu0 0
    %567 = vmatpush1.bf16.msra.mxu0 0
    %568 = vmatprep.subr.bf16.mxu0 0
    %569 = vmatpush1.bf16.msra.mxu0 0
    %570 = vmatprep.subr.bf16.mxu0 0
    %571 = vmatpush1.bf16.msra.mxu0 0
    %572 = vmatprep.subr.bf16.mxu0 0
    %573 = vmatpush1.bf16.msra.mxu0 0
    %574 = vmatprep.subr.bf16.mxu0 0
    %575 = vmatpush1.bf16.msra.mxu0 0
    %576 = vmatprep.subr.bf16.mxu0 0
    %577 = vmatpush1.bf16.msra.mxu0 0
    %578 = vmatprep.subr.bf16.mxu0 0
    %579 = vmatpush1.bf16.msra.mxu0 0
    %580 = vmatprep.mubr.bf16.mxu0 0
    %581 = vmatmul.mubr.bf16.gmra.mrb[0].mxu0 %v543
    %v582 = vpop.f32.mrb[0].mxu0
    %v583 = vadd.f32 0.0, %v582
    %v584 = vpop.f32.mrb[0].mxu0
    %v585 = vpop.f32.mrb[0].mxu0
    %v586 = vadd.f32 0.0, %v585
    %v587 = vpop.f32.mrb[0].mxu0
    %588 = vmatprep.mubr.bf16.mxu0 0
    %589 = vmatmul.mubr.bf16.gmra.mrb[0].mxu0 %v546
    %v590 = vpop.f32.mrb[0].mxu0
    %v591 = vadd.f32 0.0, %v590
    %v592 = vpop.f32.mrb[0].mxu0
    %v593 = vpop.f32.mrb[0].mxu0
    %v594 = vadd.f32 0.0, %v593
    %v595 = vpop.f32.mrb[0].mxu0
    %596 = vdwg.mxu0
    %v597 = vmax.f32 %v583, %v591
    %v598 = vmax.f32 %v586, %v594
    %v599 = vsub.f32 %v583, %v597
    %v600 = vsub.f32 %v586, %v598
    %v601 = vmul.f32 %v599, 1.442695
    %v602 = vpow.pop %v601
    %v603 = vmul.f32 %v600, 1.442695
    %v604 = vpow.pop %v603
    %v605 = vsub.f32 %v591, %v597
    %v606 = vsub.f32 %v594, %v598
    %v607 = vmul.f32 %v605, 1.442695
    %v608 = vpow.pop %v607
    %v609 = vmul.f32 %v606, 1.442695
    %v610 = vpow.pop %v609
    %v611 = vadd.f32 %v602, %v608
    %v612 = vadd.f32 %v604, %v610
    %v613 = vrcp.pop %v611
    %v614 = vrcp.pop %v612
    %v615 = vmul.f32 %v602, %v613
    %v616 = vmul.f32 %v604, %v614
    %v617 = vmul.f32 %v608, %v613
    %v618 = vmul.f32 %v610, %v614
    %v619 = vpack.c.bf16 %v616, %v615
    %v620 = vpack.c.bf16 %v618, %v617
    %vm621 = vcmask 64512
    %v623 = vsel %vm621, %v619, 0
    %v626 = vsel %vm621, %v620, 0
    %v629 = vsel %vm436, %v452, 0
    %631 = vmatprep.subr.bf16.mxu0 0
    %632 = vmatpush1.bf16.msra.mxu0 %v629
    %633 = vmatprep.subr.bf16.mxu0 0
    %634 = vmatpush1.bf16.msra.mxu0 0
    %635 = vmatprep.subr.bf16.mxu0 0
    %636 = vmatpush1.bf16.msra.mxu0 0
    %637 = vmatprep.subr.bf16.mxu0 0
    %638 = vmatpush1.bf16.msra.mxu0 0
    %639 = vmatprep.subr.bf16.mxu0 0
    %640 = vmatpush1.bf16.msra.mxu0 0
    %641 = vmatprep.subr.bf16.mxu0 0
    %642 = vmatpush1.bf16.msra.mxu0 0
    %643 = vmatprep.subr.bf16.mxu0 0
    %644 = vmatpush1.bf16.msra.mxu0 0
    %645 = vmatprep.subr.bf16.mxu0 0
    %646 = vmatpush1.bf16.msra.mxu0 0
    %647 = vmatprep.subr.bf16.mxu0 0
    %648 = vmatpush1.bf16.msra.mxu0 0
    %649 = vmatprep.subr.bf16.mxu0 0
    %650 = vmatpush1.bf16.msra.mxu0 0
    %651 = vmatprep.subr.bf16.mxu0 0
    %652 = vmatpush1.bf16.msra.mxu0 0
    %653 = vmatprep.subr.bf16.mxu0 0
    %654 = vmatpush1.bf16.msra.mxu0 0
    %655 = vmatprep.subr.bf16.mxu0 0
    %656 = vmatpush1.bf16.msra.mxu0 0
    %657 = vmatprep.subr.bf16.mxu0 0
    %658 = vmatpush1.bf16.msra.mxu0 0
    %659 = vmatprep.subr.bf16.mxu0 0
    %660 = vmatpush1.bf16.msra.mxu0 0
    %661 = vmatprep.subr.bf16.mxu0 0
    %662 = vmatpush1.bf16.msra.mxu0 0
    %663 = vmatprep.mubr.bf16.mxu0 0
    %664 = vmatmul.mubr.bf16.gmra.mrb[0].mxu0 %v623
    %v665 = vpop.f32.mrb[0].mxu0
    %v666 = vadd.f32 0.0, %v665
    %v667 = vpop.f32.mrb[0].mxu0
    %v668 = vpop.f32.mrb[0].mxu0
    %v669 = vadd.f32 0.0, %v668
    %v670 = vpop.f32.mrb[0].mxu0
    %671 = vmatprep.mubr.bf16.mxu0 0
    %672 = vmatmul.mubr.bf16.gmra.mrb[0].mxu0 %v626
    %v673 = vpop.f32.mrb[0].mxu0
    %v674 = vadd.f32 0.0, %v673
    %v675 = vpop.f32.mrb[0].mxu0
    %v676 = vpop.f32.mrb[0].mxu0
    %v677 = vadd.f32 0.0, %v676
    %v678 = vpop.f32.mrb[0].mxu0
    %679 = vdwg.mxu0
    %680 = vrot.lane.b32.xlu0 %v510, 64
    %v681 = vpop.permute.xlu0 %680
    %v683 = vmul.f32 %v666, %v681
    %v684 = vmul.f32 %v669, %v681
    %685 = vrot.lane.b32.xlu0 %v513, 64
    %v686 = vpop.permute.xlu0 %685
    %v688 = vmul.f32 %v674, %v686
    %v689 = vmul.f32 %v677, %v686
    %v690 = vadd.f32 %v683, %v688
    %v691 = vadd.f32 %v684, %v689
    %v692 = vpack.c.bf16 %v691, %v690
    %v693 = vld [vmem:[#allocation4 + $0x180] sm:$0xf]
    %v694 = vld [vmem:[#allocation4 + $0x188] sm:$0xf]
    %v695 = vld [vmem:[#allocation4 + $0x190] sm:$0xf]
    %v696 = vld [vmem:[#allocation4 + $0x198] sm:$0xf]
    %v697 = vld [vmem:[#allocation6 + $0x9] ss:$0 sm:$0xff]
    %v702 = vunpack.c.l.b16 %v693
    %v703 = vunpack.c.l.b16 %v694
    %v704 = vunpack.c.l.b16 %v695
    %v705 = vunpack.c.l.b16 %v696
    %v706 = vpack.c.b16 %v703, %v702
    %v707 = vpack.c.b16 %v705, %v704
    %v711 = vsel %vm471, %v692, 0
    %713 = vmatprep.subr.bf16.mxu0 0
    %714 = vmatpush1.bf16.msra.mxu0 %v706
    %715 = vmatprep.subr.bf16.mxu0 0
    %716 = vmatpush1.bf16.msra.mxu0 %v707
    %717 = vmatprep.subr.bf16.mxu0 0
    %718 = vmatpush1.bf16.msra.mxu0 0
    %719 = vmatprep.subr.bf16.mxu0 0
    %720 = vmatpush1.bf16.msra.mxu0 0
    %721 = vmatprep.subr.bf16.mxu0 0
    %722 = vmatpush1.bf16.msra.mxu0 0
    %723 = vmatprep.subr.bf16.mxu0 0
    %724 = vmatpush1.bf16.msra.mxu0 0
    %725 = vmatprep.subr.bf16.mxu0 0
    %726 = vmatpush1.bf16.msra.mxu0 0
    %727 = vmatprep.subr.bf16.mxu0 0
    %728 = vmatpush1.bf16.msra.mxu0 0
    %729 = vmatprep.subr.bf16.mxu0 0
    %730 = vmatpush1.bf16.msra.mxu0 0
    %731 = vmatprep.subr.bf16.mxu0 0
    %732 = vmatpush1.bf16.msra.mxu0 0
    %733 = vmatprep.subr.bf16.mxu0 0
    %734 = vmatpush1.bf16.msra.mxu0 0
    %735 = vmatprep.subr.bf16.mxu0 0
    %736 = vmatpush1.bf16.msra.mxu0 0
    %737 = vmatprep.subr.bf16.mxu0 0
    %738 = vmatpush1.bf16.msra.mxu0 0
    %739 = vmatprep.subr.bf16.mxu0 0
    %740 = vmatpush1.bf16.msra.mxu0 0
    %741 = vmatprep.subr.bf16.mxu0 0
    %742 = vmatpush1.bf16.msra.mxu0 0
    %743 = vmatprep.subr.bf16.mxu0 0
    %744 = vmatpush1.bf16.msra.mxu0 0
    %745 = vmatprep.mubr.bf16.mxu0 0
    %746 = vmatmul.mubr.bf16.gmra.mrb[0].mxu0 %v711
    %v747 = vpop.f32.mrb[0].mxu0
    %v748 = vadd.f32 %v697, %v747
    %v749 = vpop.f32.mrb[0].mxu0
    %v750 = vpop.f32.mrb[0].mxu0
    %v751 = vadd.f32 %v697, %v750
    %v752 = vpop.f32.mrb[0].mxu0
    %753 = vdwg.mxu0
    %v754 = vadd.f32 %v446, %v748
    %v755 = vadd.f32 %v447, %v751
    %v756 = vsel %vm471, %v754, 0.0
    %757 = vadd.xlane.f32.xlu0 %v756
    %v758 = vpop.xlane.xlu0 %757
    %v759 = vsel %vm471, %v755, 0.0
    %760 = vadd.xlane.f32.xlu0 %v759
    %v761 = vpop.xlane.xlu0 %760
    %v762 = vrcp.pop 32.0
    %v763 = vmul.f32 %v758, %v762
    %v764 = vmul.f32 %v761, %v762
    %v765 = vsub.f32 %v754, %v763
    %v766 = vsub.f32 %v755, %v764
    %v767 = vmul.f32 %v765, %v765
    %v768 = vmul.f32 %v766, %v766
    %v769 = vsel %vm471, %v767, 0.0
    %770 = vadd.xlane.f32.xlu0 %v769
    %v771 = vpop.xlane.xlu0 %770
    %v772 = vsel %vm471, %v768, 0.0
    %773 = vadd.xlane.f32.xlu0 %v772
    %v774 = vpop.xlane.xlu0 %773
    %v775 = vmul.f32 %v771, %v762
    %v776 = vmul.f32 %v774, %v762
    %v777 = vadd.f32 %v775, 1e-05
    %v778 = vadd.f32 %v776, 1e-05
    %v779 = vrsqrt.pop %v777
    %v780 = vrsqrt.pop %v778
    %v781 = vmul.f32 %v765, %v779
    %v782 = vmul.f32 %v766, %v780
    %v783 = vld [vmem:[#allocation6 + $0x2] ss:$0 sm:$0xff]
    %v784 = vmul.f32 %v781, %v783
    %v785 = vmul.f32 %v782, %v783
    %v786 = vld [vmem:[#allocation6 + $0xa] ss:$0 sm:$0xff]
    %v787 = vadd.f32 %v784, %v786
    %v788 = vadd.f32 %v785, %v786
    %v789 = vpack.c.bf16 %v788, %v787
    %v790 = vld [vmem:[#allocation4 + $0x120] sm:$0xf]
    %v791 = vld [vmem:[#allocation4 + $0x128] sm:$0xf]
    %v792 = vld [vmem:[#allocation4 + $0x130] sm:$0xf]
    %v793 = vld [vmem:[#allocation4 + $0x138] sm:$0xf]
    %v794 = vld [vmem:[#allocation6 + $0x3] ss:$0 sm:$0xff]
    %v799 = vunpack.c.l.b16 %v790
    %v800 = vunpack.c.l.b16 %v791
    %v801 = vunpack.c.l.b16 %v792
    %v802 = vunpack.c.l.b16 %v793
    %v803 = vpack.c.b16 %v800, %v799
    %v804 = vpack.c.b16 %v802, %v801
    %v808 = vsel %vm471, %v789, 0
    %810 = vmatprep.subr.bf16.mxu0 0
    %811 = vmatpush1.bf16.msra.mxu0 %v803
    %812 = vmatprep.subr.bf16.mxu0 0
    %813 = vmatpush1.bf16.msra.mxu0 %v804
    %814 = vmatprep.subr.bf16.mxu0 0
    %815 = vmatpush1.bf16.msra.mxu0 0
    %816 = vmatprep.subr.bf16.mxu0 0
    %817 = vmatpush1.bf16.msra.mxu0 0
    %818 = vmatprep.subr.bf16.mxu0 0
    %819 = vmatpush1.bf16.msra.mxu0 0
    %820 = vmatprep.subr.bf16.mxu0 0
    %821 = vmatpush1.bf16.msra.mxu0 0
    %822 = vmatprep.subr.bf16.mxu0 0
    %823 = vmatpush1.bf16.msra.mxu0 0
    %824 = vmatprep.subr.bf16.mxu0 0
    %825 = vmatpush1.bf16.msra.mxu0 0
    %826 = vmatprep.subr.bf16.mxu0 0
    %827 = vmatpush1.bf16.msra.mxu0 0
    %828 = vmatprep.subr.bf16.mxu0 0
    %829 = vmatpush1.bf16.msra.mxu0 0
    %830 = vmatprep.subr.bf16.mxu0 0
    %831 = vmatpush1.bf16.msra.mxu0 0
    %832 = vmatprep.subr.bf16.mxu0 0
    %833 = vmatpush1.bf16.msra.mxu0 0
    %834 = vmatprep.subr.bf16.mxu0 0
    %835 = vmatpush1.bf16.msra.mxu0 0
    %836 = vmatprep.subr.bf16.mxu0 0
    %837 = vmatpush1.bf16.msra.mxu0 0
    %838 = vmatprep.subr.bf16.mxu0 0
    %839 = vmatpush1.bf16.msra.mxu0 0
    %840 = vmatprep.subr.bf16.mxu0 0
    %841 = vmatpush1.bf16.msra.mxu0 0
    %842 = vmatprep.mubr.bf16.mxu0 0
    %843 = vmatmul.mubr.bf16.gmra.mrb[0].mxu0 %v808
    %v844 = vpop.f32.mrb[0].mxu0
    %v845 = vadd.f32 %v794, %v844
    %v846 = vpop.f32.mrb[0].mxu0
    %v847 = vpop.f32.mrb[0].mxu0
    %v848 = vadd.f32 %v794, %v847
    %v849 = vpop.f32.mrb[0].mxu0
    %850 = vdwg.mxu0
    %v851 = vmax.f32 %v845, 0.0
    %v852 = vmax.f32 %v848, 0.0
    %v853 = vpack.c.bf16 %v852, %v851
    %v854 = vld [vmem:[#allocation4 + $0x140] sm:$0xf]
    %v855 = vld [vmem:[#allocation4 + $0x148] sm:$0xf]
    %v856 = vld [vmem:[#allocation4 + $0x150] sm:$0xf]
    %v857 = vld [vmem:[#allocation4 + $0x158] sm:$0xf]
    %v858 = vld [vmem:[#allocation4 + $0x160] sm:$0xf]
    %v859 = vld [vmem:[#allocation4 + $0x168] sm:$0xf]
    %v860 = vld [vmem:[#allocation4 + $0x170] sm:$0xf]
    %v861 = vld [vmem:[#allocation4 + $0x178] sm:$0xf]
    %v862 = vld [vmem:[#allocation6 + $0xb] ss:$0 sm:$0xff]
    %v871 = vunpack.c.l.b16 %v854
    %v872 = vunpack.c.l.b16 %v855
    %v873 = vunpack.c.l.b16 %v856
    %v874 = vunpack.c.l.b16 %v857
    %v875 = vunpack.c.l.b16 %v858
    %v876 = vunpack.c.l.b16 %v859
    %v877 = vunpack.c.l.b16 %v860
    %v878 = vunpack.c.l.b16 %v861
    %v879 = vpack.c.b16 %v872, %v871
    %v880 = vpack.c.b16 %v874, %v873
    %v881 = vpack.c.b16 %v876, %v875
    %v882 = vpack.c.b16 %v878, %v877
    %vm887 = vcmask 523264
    %v889 = vsel %vm887, %v853, 0
    %891 = vmatprep.subr.bf16.mxu0 0
    %892 = vmatpush1.bf16.msra.mxu0 %v879
    %893 = vmatprep.subr.bf16.mxu0 0
    %894 = vmatpush1.bf16.msra.mxu0 %v880
    %895 = vmatprep.subr.bf16.mxu0 0
    %896 = vmatpush1.bf16.msra.mxu0 %v881
    %897 = vmatprep.subr.bf16.mxu0 0
    %898 = vmatpush1.bf16.msra.mxu0 %v882
    %899 = vmatprep.subr.bf16.mxu0 0
    %900 = vmatpush1.bf16.msra.mxu0 0
    %901 = vmatprep.subr.bf16.mxu0 0
    %902 = vmatpush1.bf16.msra.mxu0 0
    %903 = vmatprep.subr.bf16.mxu0 0
    %904 = vmatpush1.bf16.msra.mxu0 0
    %905 = vmatprep.subr.bf16.mxu0 0
    %906 = vmatpush1.bf16.msra.mxu0 0
    %907 = vmatprep.subr.bf16.mxu0 0
    %908 = vmatpush1.bf16.msra.mxu0 0
    %909 = vmatprep.subr.bf16.mxu0 0
    %910 = vmatpush1.bf16.msra.mxu0 0
    %911 = vmatprep.subr.bf16.mxu0 0
    %912 = vmatpush1.bf16.msra.mxu0 0
    %913 = vmatprep.subr.bf16.mxu0 0
    %914 = vmatpush1.bf16.msra.mxu0 0
    %915 = vmatprep.subr.bf16.mxu0 0
    %916 = vmatpush1.bf16.msra.mxu0 0
    %917 = vmatprep.subr.bf16.mxu0 0
    %918 = vmatpush1.bf16.msra.mxu0 0
    %919 = vmatprep.subr.bf16.mxu0 0
    %920 = vmatpush1.bf16.msra.mxu0 0
    %921 = vmatprep.subr.bf16.mxu0 0
    %922 = vmatpush1.bf16.msra.mxu0 0
    %923 = vmatprep.mubr.bf16.mxu0 0
    %924 = vmatmul.mubr.bf16.gmra.mrb[0].mxu0 %v889
    %v925 = vpop.f32.mrb[0].mxu0
    %v926 = vadd.f32 %v862, %v925
    %v927 = vpop.f32.mrb[0].mxu0
    %v928 = vpop.f32.mrb[0].mxu0
    %v929 = vadd.f32 %v862, %v928
    %v930 = vpop.f32.mrb[0].mxu0
    %931 = vdwg.mxu0
    %v932 = vadd.f32 %v787, %v926
    %v933 = vadd.f32 %v788, %v929
    %v934 = vsel %vm471, %v932, 0.0
    %935 = vadd.xlane.f32.xlu0 %v934
    %v936 = vpop.xlane.xlu0 %935
    %v937 = vsel %vm471, %v933, 0.0
    %938 = vadd.xlane.f32.xlu0 %v937
    %v939 = vpop.xlane.xlu0 %938
    %v940 = vmul.f32 %v936, %v762
    %v941 = vmul.f32 %v939, %v762
    %v942 = vsub.f32 %v932, %v940
    %v943 = vsub.f32 %v933, %v941
    %v944 = vmul.f32 %v942, %v942
    %v945 = vmul.f32 %v943, %v943
    %v946 = vsel %vm471, %v944, 0.0
    %947 = vadd.xlane.f32.xlu0 %v946
    %v948 = vpop.xlane.xlu0 %947
    %v949 = vsel %vm471, %v945, 0.0
    %950 = vadd.xlane.f32.xlu0 %v949
    %v951 = vpop.xlane.xlu0 %950
    %v952 = vmul.f32 %v948, %v762
    %v953 = vmul.f32 %v951, %v762
    %v954 = vadd.f32 %v952, 1e-05
    %v955 = vadd.f32 %v953, 1e-05
    %v956 = vrsqrt.pop %v954
    %v957 = vrsqrt.pop %v955
    %v958 = vmul.f32 %v942, %v956
    %v959 = vmul.f32 %v943, %v957
    %v960 = vld [vmem:[#allocation6 + $0x4] ss:$0 sm:$0xff]
    %v961 = vmul.f32 %v958, %v960
    %v962 = vmul.f32 %v959, %v960
    %v963 = vld [vmem:[#allocation6 + $0xc] ss:$0 sm:$0xff]
    %v964 = vadd.f32 %v961, %v963
    %v965 = vadd.f32 %v962, %v963
    %v966 = vpack.c.bf16 %v965, %v964
    %v967 = vld [vmem:[#allocation4 + $0x104] sm:$0xf]
    %v968 = vld [vmem:[#allocation4 + $0x10c] sm:$0xf]
    %v969 = vld [vmem:[#allocation4 + $0x114] sm:$0xf]
    %v970 = vld [vmem:[#allocation4 + $0x11c] sm:$0xf]
    %v971 = vld [vmem:[#allocation6 + $0x5] ss:$0 sm:$0xff]
    %v976 = vunpack.c.l.b16 %v967
    %v977 = vunpack.c.l.b16 %v968
    %v978 = vunpack.c.l.b16 %v969
    %v979 = vunpack.c.l.b16 %v970
    %v980 = vpack.c.b16 %v977, %v976
    %v981 = vpack.c.b16 %v979, %v978
    %v985 = vsel %vm471, %v966, 0
    %987 = vmatprep.subr.bf16.mxu0 0
    %988 = vmatpush1.bf16.msra.mxu0 %v980
    %989 = vmatprep.subr.bf16.mxu0 0
    %990 = vmatpush1.bf16.msra.mxu0 %v981
    %991 = vmatprep.subr.bf16.mxu0 0
    %992 = vmatpush1.bf16.msra.mxu0 0
    %993 = vmatprep.subr.bf16.mxu0 0
    %994 = vmatpush1.bf16.msra.mxu0 0
    %995 = vmatprep.subr.bf16.mxu0 0
    %996 = vmatpush1.bf16.msra.mxu0 0
    %997 = vmatprep.subr.bf16.mxu0 0
    %998 = vmatpush1.bf16.msra.mxu0 0
    %999 = vmatprep.subr.bf16.mxu0 0
    %1000 = vmatpush1.bf16.msra.mxu0 0
    %1001 = vmatprep.subr.bf16.mxu0 0
    %1002 = vmatpush1.bf16.msra.mxu0 0
    %1003 = vmatprep.subr.bf16.mxu0 0
    %1004 = vmatpush1.bf16.msra.mxu0 0
    %1005 = vmatprep.subr.bf16.mxu0 0
    %1006 = vmatpush1.bf16.msra.mxu0 0
    %1007 = vmatprep.subr.bf16.mxu0 0
    %1008 = vmatpush1.bf16.msra.mxu0 0
    %1009 = vmatprep.subr.bf16.mxu0 0
    %1010 = vmatpush1.bf16.msra.mxu0 0
    %1011 = vmatprep.subr.bf16.mxu0 0
    %1012 = vmatpush1.bf16.msra.mxu0 0
    %1013 = vmatprep.subr.bf16.mxu0 0
    %1014 = vmatpush1.bf16.msra.mxu0 0
    %1015 = vmatprep.subr.bf16.mxu0 0
    %1016 = vmatpush1.bf16.msra.mxu0 0
    %1017 = vmatprep.subr.bf16.mxu0 0
    %1018 = vmatpush1.bf16.msra.mxu0 0
    %1019 = vmatprep.mubr.bf16.mxu0 0
    %1020 = vmatmul.mubr.bf16.gmra.mrb[0].mxu0 %v985
    %v1021 = vpop.f32.mrb[0].mxu0
    %v1022 = vadd.f32 %v971, %v1021
    %v1023 = vpop.f32.mrb[0].mxu0
    %v1024 = vpop.f32.mrb[0].mxu0
    %v1025 = vadd.f32 %v971, %v1024
    %v1026 = vpop.f32.mrb[0].mxu0
    %1027 = vdwg.mxu0
    %1029 = vrot.lane.b32.xlu0 %v1022, 96
    %v1030 = vpop.permute.xlu0 %1029
    %v1032 = vmul.f32 %v1022, %v1030
    %v1033 = vmul.f32 %v1025, %v1030
    %1035 = vrot.lane.b32.xlu0 %v1025, 96
    %v1036 = vpop.permute.xlu0 %1035
    %v1038 = vmul.f32 %v1022, %v1036
    %v1039 = vmul.f32 %v1025, %v1036
    %v1040 = vpack.c.bf16 %v1033, %v1032
    %v1041 = vpack.c.bf16 %v1039, %v1038
    %v1043 = vsel %vm471, %v1040, 0
    %v1046 = vsel %vm471, %v1041, 0
    %1048 = vmatprep.subr.bf16.mxu0 0
    %1049 = vmatpush1.bf16.msra.mxu0 %v538
    %1050 = vmatprep.subr.bf16.mxu0 0
    %1051 = vmatpush1.bf16.msra.mxu0 %v539
    %1052 = vmatprep.subr.bf16.mxu0 0
    %1053 = vmatpush1.bf16.msra.mxu0 0
    %1054 = vmatprep.subr.bf16.mxu0 0
    %1055 = vmatpush1.bf16.msra.mxu0 0
    %1056 = vmatprep.subr.bf16.mxu0 0
    %1057 = vmatpush1.bf16.msra.mxu0 0
    %1058 = vmatprep.subr.bf16.mxu0 0
    %1059 = vmatpush1.bf16.msra.mxu0 0
    %1060 = vmatprep.subr.bf16.mxu0 0
    %1061 = vmatpush1.bf16.msra.mxu0 0
    %1062 = vmatprep.subr.bf16.mxu0 0
    %1063 = vmatpush1.bf16.msra.mxu0 0
    %1064 = vmatprep.subr.bf16.mxu0 0
    %1065 = vmatpush1.bf16.msra.mxu0 0
    %1066 = vmatprep.subr.bf16.mxu0 0
    %1067 = vmatpush1.bf16.msra.mxu0 0
    %1068 = vmatprep.subr.bf16.mxu0 0
    %1069 = vmatpush1.bf16.msra.mxu0 0
    %1070 = vmatprep.subr.bf16.mxu0 0
    %1071 = vmatpush1.bf16.msra.mxu0 0
    %1072 = vmatprep.subr.bf16.mxu0 0
    %1073 = vmatpush1.bf16.msra.mxu0 0
    %1074 = vmatprep.subr.bf16.mxu0 0
    %1075 = vmatpush1.bf16.msra.mxu0 0
    %1076 = vmatprep.subr.bf16.mxu0 0
    %1077 = vmatpush1.bf16.msra.mxu0 0
    %1078 = vmatprep.subr.bf16.mxu0 0
    %1079 = vmatpush1.bf16.msra.mxu0 0
    %1080 = vmatprep.mubr.bf16.mxu0 0
    %1081 = vmatmul.mubr.bf16.gmra.mrb[0].mxu0 %v1043
    %v1082 = vpop.f32.mrb[0].mxu0
    %v1083 = vadd.f32 0.0, %v1082
    %v1084 = vpop.f32.mrb[0].mxu0
    %v1085 = vpop.f32.mrb[0].mxu0
    %v1086 = vadd.f32 0.0, %v1085
    %v1087 = vpop.f32.mrb[0].mxu0
    %1088 = vmatprep.mubr.bf16.mxu0 0
    %1089 = vmatmul.mubr.bf16.gmra.mrb[0].mxu0 %v1046
    %v1090 = vpop.f32.mrb[0].mxu0
    %v1091 = vadd.f32 0.0, %v1090
    %v1092 = vpop.f32.mrb[0].mxu0
    %v1093 = vpop.f32.mrb[0].mxu0
    %v1094 = vadd.f32 0.0, %v1093
    %v1095 = vpop.f32.mrb[0].mxu0
    %1096 = vdwg.mxu0
    %v1097 = vmax.f32 %v1083, %v1091
    %v1098 = vmax.f32 %v1086, %v1094
    %v1099 = vsub.f32 %v1083, %v1097
    %v1100 = vsub.f32 %v1086, %v1098
    %v1101 = vmul.f32 %v1099, 1.442695
    %v1102 = vpow.pop %v1101
    %v1103 = vmul.f32 %v1100, 1.442695
    %v1104 = vpow.pop %v1103
    %v1105 = vsub.f32 %v1091, %v1097
    %v1106 = vsub.f32 %v1094, %v1098
    %v1107 = vmul.f32 %v1105, 1.442695
    %v1108 = vpow.pop %v1107
    %v1109 = vmul.f32 %v1106, 1.442695
    %v1110 = vpow.pop %v1109
    %v1111 = vadd.f32 %v1102, %v1108
    %v1112 = vadd.f32 %v1104, %v1110
    %v1113 = vrcp.pop %v1111
    %v1114 = vrcp.pop %v1112
    %v1115 = vmul.f32 %v1102, %v1113
    %v1116 = vmul.f32 %v1104, %v1114
    %v1117 = vmul.f32 %v1108, %v1113
    %v1118 = vmul.f32 %v1110, %v1114
    %v1119 = vpack.c.bf16 %v1116, %v1115
    %v1120 = vpack.c.bf16 %v1118, %v1117
    %v1122 = vsel %vm621, %v1119, 0
    %v1125 = vsel %vm621, %v1120, 0
    %1127 = vmatprep.subr.bf16.mxu0 0
    %1128 = vmatpush1.bf16.msra.mxu0 %v629
    %1129 = vmatprep.subr.bf16.mxu0 0
    %1130 = vmatpush1.bf16.msra.mxu0 0
    %1131 = vmatprep.subr.bf16.mxu0 0
    %1132 = vmatpush1.bf16.msra.mxu0 0
    %1133 = vmatprep.subr.bf16.mxu0 0
    %1134 = vmatpush1.bf16.msra.mxu0 0
    %1135 = vmatprep.subr.bf16.mxu0 0
    %1136 = vmatpush1.bf16.msra.mxu0 0
    %1137 = vmatprep.subr.bf16.mxu0 0
    %1138 = vmatpush1.bf16.msra.mxu0 0
    %1139 = vmatprep.subr.bf16.mxu0 0
    %1140 = vmatpush1.bf16.msra.mxu0 0
    %1141 = vmatprep.subr.bf16.mxu0 0
    %1142 = vmatpush1.bf16.msra.mxu0 0
    %1143 = vmatprep.subr.bf16.mxu0 0
    %1144 = vmatpush1.bf16.msra.mxu0 0
    %1145 = vmatprep.subr.bf16.mxu0 0
    %1146 = vmatpush1.bf16.msra.mxu0 0
    %1147 = vmatprep.subr.bf16.mxu0 0
    %1148 = vmatpush1.bf16.msra.mxu0 0
    %1149 = vmatprep.subr.bf16.mxu0 0
    %1150 = vmatpush1.bf16.msra.mxu0 0
    %1151 = vmatprep.subr.bf16.mxu0 0
    %1152 = vmatpush1.bf16.msra.mxu0 0
    %1153 = vmatprep.subr.bf16.mxu0 0
    %1154 = vmatpush1.bf16.msra.mxu0 0
    %1155 = vmatprep.subr.bf16.mxu0 0
    %1156 = vmatpush1.bf16.msra.mxu0 0
    %1157 = vmatprep.subr.bf16.mxu0 0
    %1158 = vmatpush1.bf16.msra.mxu0 0
    %1159 = vmatprep.mubr.bf16.mxu0 0
    %1160 = vmatmul.mubr.bf16.gmra.mrb[0].mxu0 %v1122
    %v1161 = vpop.f32.mrb[0].mxu0
    %v1162 = vadd.f32 0.0, %v1161
    %v1163 = vpop.f32.mrb[0].mxu0
    %v1164 = vpop.f32.mrb[0].mxu0
    %v1165 = vadd.f32 0.0, %v1164
    %v1166 = vpop.f32.mrb[0].mxu0
    %1167 = vmatprep.mubr.bf16.mxu0 0
    %1168 = vmatmul.mubr.bf16.gmra.mrb[0].mxu0 %v1125
    %v1169 = vpop.f32.mrb[0].mxu0
    %v1170 = vadd.f32 0.0, %v1169
    %v1171 = vpop.f32.mrb[0].mxu0
    %v1172 = vpop.f32.mrb[0].mxu0
    %v1173 = vadd.f32 0.0, %v1172
    %v1174 = vpop.f32.mrb[0].mxu0
    %1175 = vdwg.mxu0
    %1176 = vrot.lane.b32.xlu0 %v1022, 64
    %v1177 = vpop.permute.xlu0 %1176
    %v1179 = vmul.f32 %v1162, %v1177
    %v1180 = vmul.f32 %v1165, %v1177
    %1181 = vrot.lane.b32.xlu0 %v1025, 64
    %v1182 = vpop.permute.xlu0 %1181
    %v1184 = vmul.f32 %v1170, %v1182
    %v1185 = vmul.f32 %v1173, %v1182
    %v1186 = vadd.f32 %v1179, %v1184
    %v1187 = vadd.f32 %v1180, %v1185
    %v1188 = vpack.c.bf16 %v1187, %v1186
    %v1189 = vld [vmem:[#allocation4 + $0x184] sm:$0xf]
    %v1190 = vld [vmem:[#allocation4 + $0x18c] sm:$0xf]
    %v1191 = vld [vmem:[#allocation4 + $0x194] sm:$0xf]
    %v1192 = vld [vmem:[#allocation4 + $0x19c] sm:$0xf]
    %v1193 = vld [vmem:[#allocation6 + $0xd] ss:$0 sm:$0xff]
    %v1198 = vunpack.c.l.b16 %v1189
    %v1199 = vunpack.c.l.b16 %v1190
    %v1200 = vunpack.c.l.b16 %v1191
    %v1201 = vunpack.c.l.b16 %v1192
    %v1202 = vpack.c.b16 %v1199, %v1198
    %v1203 = vpack.c.b16 %v1201, %v1200
    %v1207 = vsel %vm471, %v1188, 0
    %1209 = vmatprep.subr.bf16.mxu0 0
    %1210 = vmatpush1.bf16.msra.mxu0 %v1202
    %1211 = vmatprep.subr.bf16.mxu0 0
    %1212 = vmatpush1.bf16.msra.mxu0 %v1203
    %1213 = vmatprep.subr.bf16.mxu0 0
    %1214 = vmatpush1.bf16.msra.mxu0 0
    %1215 = vmatprep.subr.bf16.mxu0 0
    %1216 = vmatpush1.bf16.msra.mxu0 0
    %1217 = vmatprep.subr.bf16.mxu0 0
    %1218 = vmatpush1.bf16.msra.mxu0 0
    %1219 = vmatprep.subr.bf16.mxu0 0
    %1220 = vmatpush1.bf16.msra.mxu0 0
    %1221 = vmatprep.subr.bf16.mxu0 0
    %1222 = vmatpush1.bf16.msra.mxu0 0
    %1223 = vmatprep.subr.bf16.mxu0 0
    %1224 = vmatpush1.bf16.msra.mxu0 0
    %1225 = vmatprep.subr.bf16.mxu0 0
    %1226 = vmatpush1.bf16.msra.mxu0 0
    %1227 = vmatprep.subr.bf16.mxu0 0
    %1228 = vmatpush1.bf16.msra.mxu0 0
    %1229 = vmatprep.subr.bf16.mxu0 0
    %1230 = vmatpush1.bf16.msra.mxu0 0
    %1231 = vmatprep.subr.bf16.mxu0 0
    %1232 = vmatpush1.bf16.msra.mxu0 0
    %1233 = vmatprep.subr.bf16.mxu0 0
    %1234 = vmatpush1.bf16.msra.mxu0 0
    %1235 = vmatprep.subr.bf16.mxu0 0
    %1236 = vmatpush1.bf16.msra.mxu0 0
    %1237 = vmatprep.subr.bf16.mxu0 0
    %1238 = vmatpush1.bf16.msra.mxu0 0
    %1239 = vmatprep.subr.bf16.mxu0 0
    %1240 = vmatpush1.bf16.msra.mxu0 0
    %1241 = vmatprep.mubr.bf16.mxu0 0
    %1242 = vmatmul.mubr.bf16.gmra.mrb[0].mxu0 %v1207
    %v1243 = vpop.f32.mrb[0].mxu0
    %v1244 = vadd.f32 %v1193, %v1243
    %v1245 = vpop.f32.mrb[0].mxu0
    %v1246 = vpop.f32.mrb[0].mxu0
    %v1247 = vadd.f32 %v1193, %v1246
    %v1248 = vpop.f32.mrb[0].mxu0
    %1249 = vdwg.mxu0
    %v1250 = vadd.f32 %v964, %v1244
    %v1251 = vadd.f32 %v965, %v1247
    %v1252 = vsel %vm471, %v1250, 0.0
    %1253 = vadd.xlane.f32.xlu0 %v1252
    %v1254 = vpop.xlane.xlu0 %1253
    %v1255 = vsel %vm471, %v1251, 0.0
    %1256 = vadd.xlane.f32.xlu0 %v1255
    %v1257 = vpop.xlane.xlu0 %1256
    %v1258 = vmul.f32 %v1254, %v762
    %v1259 = vmul.f32 %v1257, %v762
    %v1260 = vsub.f32 %v1250, %v1258
    %v1261 = vsub.f32 %v1251, %v1259
    %v1262 = vmul.f32 %v1260, %v1260
    %v1263 = vmul.f32 %v1261, %v1261
    %v1264 = vsel %vm471, %v1262, 0.0
    %1265 = vadd.xlane.f32.xlu0 %v1264
    %v1266 = vpop.xlane.xlu0 %1265
    %v1267 = vsel %vm471, %v1263, 0.0
    %1268 = vadd.xlane.f32.xlu0 %v1267
    %v1269 = vpop.xlane.xlu0 %1268
    %v1270 = vmul.f32 %v1266, %v762
    %v1271 = vmul.f32 %v1269, %v762
    %v1272 = vadd.f32 %v1270, 1e-05
    %v1273 = vadd.f32 %v1271, 1e-05
    %v1274 = vrsqrt.pop %v1272
    %v1275 = vrsqrt.pop %v1273
    %v1276 = vmul.f32 %v1260, %v1274
    %v1277 = vmul.f32 %v1261, %v1275
    %v1278 = vld [vmem:[#allocation6 + $0x6] ss:$0 sm:$0xff]
    %v1279 = vmul.f32 %v1276, %v1278
    %v1280 = vmul.f32 %v1277, %v1278
    %v1281 = vld [vmem:[#allocation6 + $0xe] ss:$0 sm:$0xff]
    %v1282 = vadd.f32 %v1279, %v1281
    %v1283 = vadd.f32 %v1280, %v1281
    %v1284 = vpack.c.bf16 %v1283, %v1282
    %v1285 = vld [vmem:[#allocation4 + $0x124] sm:$0xf]
    %v1286 = vld [vmem:[#allocation4 + $0x12c] sm:$0xf]
    %v1287 = vld [vmem:[#allocation4 + $0x134] sm:$0xf]
    %v1288 = vld [vmem:[#allocation4 + $0x13c] sm:$0xf]
    %v1289 = vld [vmem:[#allocation6 + $0x7] ss:$0 sm:$0xff]
    %v1294 = vunpack.c.l.b16 %v1285
    %v1295 = vunpack.c.l.b16 %v1286
    %v1296 = vunpack.c.l.b16 %v1287
    %v1297 = vunpack.c.l.b16 %v1288
    %v1298 = vpack.c.b16 %v1295, %v1294
    %v1299 = vpack.c.b16 %v1297, %v1296
    %v1303 = vsel %vm471, %v1284, 0
    %1305 = vmatprep.subr.bf16.mxu0 0
    %1306 = vmatpush1.bf16.msra.mxu0 %v1298
    %1307 = vmatprep.subr.bf16.mxu0 0
    %1308 = vmatpush1.bf16.msra.mxu0 %v1299
    %1309 = vmatprep.subr.bf16.mxu0 0
    %1310 = vmatpush1.bf16.msra.mxu0 0
    %1311 = vmatprep.subr.bf16.mxu0 0
    %1312 = vmatpush1.bf16.msra.mxu0 0
    %1313 = vmatprep.subr.bf16.mxu0 0
    %1314 = vmatpush1.bf16.msra.mxu0 0
    %1315 = vmatprep.subr.bf16.mxu0 0
    %1316 = vmatpush1.bf16.msra.mxu0 0
    %1317 = vmatprep.subr.bf16.mxu0 0
    %1318 = vmatpush1.bf16.msra.mxu0 0
    %1319 = vmatprep.subr.bf16.mxu0 0
    %1320 = vmatpush1.bf16.msra.mxu0 0
    %1321 = vmatprep.subr.bf16.mxu0 0
    %1322 = vmatpush1.bf16.msra.mxu0 0
    %1323 = vmatprep.subr.bf16.mxu0 0
    %1324 = vmatpush1.bf16.msra.mxu0 0
    %1325 = vmatprep.subr.bf16.mxu0 0
    %1326 = vmatpush1.bf16.msra.mxu0 0
    %1327 = vmatprep.subr.bf16.mxu0 0
    %1328 = vmatpush1.bf16.msra.mxu0 0
    %1329 = vmatprep.subr.bf16.mxu0 0
    %1330 = vmatpush1.bf16.msra.mxu0 0
    %1331 = vmatprep.subr.bf16.mxu0 0
    %1332 = vmatpush1.bf16.msra.mxu0 0
    %1333 = vmatprep.subr.bf16.mxu0 0
    %1334 = vmatpush1.bf16.msra.mxu0 0
    %1335 = vmatprep.subr.bf16.mxu0 0
    %1336 = vmatpush1.bf16.msra.mxu0 0
    %1337 = vmatprep.mubr.bf16.mxu0 0
    %1338 = vmatmul.mubr.bf16.gmra.mrb[0].mxu0 %v1303
    %v1339 = vpop.f32.mrb[0].mxu0
    %v1340 = vadd.f32 %v1289, %v1339
    %v1341 = vpop.f32.mrb[0].mxu0
    %v1342 = vpop.f32.mrb[0].mxu0
    %v1343 = vadd.f32 %v1289, %v1342
    %v1344 = vpop.f32.mrb[0].mxu0
    %1345 = vdwg.mxu0
    %v1346 = vmax.f32 %v1340, 0.0
    %v1347 = vmax.f32 %v1343, 0.0
    %v1348 = vpack.c.bf16 %v1347, %v1346
    %v1349 = vld [vmem:[#allocation4 + $0x144] sm:$0xf]
    %v1350 = vld [vmem:[#allocation4 + $0x14c] sm:$0xf]
    %v1351 = vld [vmem:[#allocation4 + $0x154] sm:$0xf]
    %v1352 = vld [vmem:[#allocation4 + $0x15c] sm:$0xf]
    %v1353 = vld [vmem:[#allocation4 + $0x164] sm:$0xf]
    %v1354 = vld [vmem:[#allocation4 + $0x16c] sm:$0xf]
    %v1355 = vld [vmem:[#allocation4 + $0x174] sm:$0xf]
    %v1356 = vld [vmem:[#allocation4 + $0x17c] sm:$0xf]
    %v1357 = vld [vmem:[#allocation6 + $0xf] ss:$0 sm:$0xff]
    %v1366 = vunpack.c.l.b16 %v1349
    %v1367 = vunpack.c.l.b16 %v1350
    %v1368 = vunpack.c.l.b16 %v1351
    %v1369 = vunpack.c.l.b16 %v1352
    %v1370 = vunpack.c.l.b16 %v1353
    %v1371 = vunpack.c.l.b16 %v1354
    %v1372 = vunpack.c.l.b16 %v1355
    %v1373 = vunpack.c.l.b16 %v1356
    %v1374 = vpack.c.b16 %v1367, %v1366
    %v1375 = vpack.c.b16 %v1369, %v1368
    %v1376 = vpack.c.b16 %v1371, %v1370
    %v1377 = vpack.c.b16 %v1373, %v1372
    %v1383 = vsel %vm887, %v1348, 0
    %1385 = vmatprep.subr.bf16.mxu0 0
    %1386 = vmatpush1.bf16.msra.mxu0 %v1374
    %1387 = vmatprep.subr.bf16.mxu0 0
    %1388 = vmatpush1.bf16.msra.mxu0 %v1375
    %1389 = vmatprep.subr.bf16.mxu0 0
    %1390 = vmatpush1.bf16.msra.mxu0 %v1376
    %1391 = vmatprep.subr.bf16.mxu0 0
    %1392 = vmatpush1.bf16.msra.mxu0 %v1377
    %1393 = vmatprep.subr.bf16.mxu0 0
    %1394 = vmatpush1.bf16.msra.mxu0 0
    %1395 = vmatprep.subr.bf16.mxu0 0
    %1396 = vmatpush1.bf16.msra.mxu0 0
    %1397 = vmatprep.subr.bf16.mxu0 0
    %1398 = vmatpush1.bf16.msra.mxu0 0
    %1399 = vmatprep.subr.bf16.mxu0 0
    %1400 = vmatpush1.bf16.msra.mxu0 0
    %1401 = vmatprep.subr.bf16.mxu0 0
    %1402 = vmatpush1.bf16.msra.mxu0 0
    %1403 = vmatprep.subr.bf16.mxu0 0
    %1404 = vmatpush1.bf16.msra.mxu0 0
    %1405 = vmatprep.subr.bf16.mxu0 0
    %1406 = vmatpush1.bf16.msra.mxu0 0
    %1407 = vmatprep.subr.bf16.mxu0 0
    %1408 = vmatpush1.bf16.msra.mxu0 0
    %1409 = vmatprep.subr.bf16.mxu0 0
    %1410 = vmatpush1.bf16.msra.mxu0 0
    %1411 = vmatprep.subr.bf16.mxu0 0
    %1412 = vmatpush1.bf16.msra.mxu0 0
    %1413 = vmatprep.subr.bf16.mxu0 0
    %1414 = vmatpush1.bf16.msra.mxu0 0
    %1415 = vmatprep.subr.bf16.mxu0 0
    %1416 = vmatpush1.bf16.msra.mxu0 0
    %1417 = vmatprep.mubr.bf16.mxu0 0
    %1418 = vmatmul.mubr.bf16.gmra.mrb[0].mxu0 %v1383
    %v1419 = vpop.f32.mrb[0].mxu0
    %v1420 = vadd.f32 %v1357, %v1419
    %v1421 = vpop.f32.mrb[0].mxu0
    %v1422 = vpop.f32.mrb[0].mxu0
    %v1423 = vadd.f32 %v1357, %v1422
    %v1424 = vpop.f32.mrb[0].mxu0
    %1425 = vdwg.mxu0
    %v1426 = vadd.f32 %v1282, %v1420
    %v1427 = vadd.f32 %v1283, %v1423
    %v1428 = vsel %vm471, %v1426, 0.0
    %1429 = vadd.xlane.f32.xlu0 %v1428
    %v1430 = vpop.xlane.xlu0 %1429
    %v1431 = vsel %vm471, %v1427, 0.0
    %1432 = vadd.xlane.f32.xlu0 %v1431
    %v1433 = vpop.xlane.xlu0 %1432
    %v1434 = vmul.f32 %v1430, %v762
    %v1435 = vmul.f32 %v1433, %v762
    %v1436 = vsub.f32 %v1426, %v1434
    %v1437 = vsub.f32 %v1427, %v1435
    %v1438 = vmul.f32 %v1436, %v1436
    %v1439 = vmul.f32 %v1437, %v1437
    %v1440 = vsel %vm471, %v1438, 0.0
    %1441 = vadd.xlane.f32.xlu0 %v1440
    %v1442 = vpop.xlane.xlu0 %1441
    %v1443 = vsel %vm471, %v1439, 0.0
    %1444 = vadd.xlane.f32.xlu0 %v1443
    %v1445 = vpop.xlane.xlu0 %1444
    %v1446 = vmul.f32 %v1442, %v762
    %v1447 = vmul.f32 %v1445, %v762
    %v1448 = vadd.f32 %v1446, 1e-05
    %v1449 = vadd.f32 %v1447, 1e-05
    %v1450 = vrsqrt.pop %v1448
    %v1451 = vrsqrt.pop %v1449
    %v1452 = vmul.f32 %v1436, %v1450
    %v1453 = vmul.f32 %v1437, %v1451
    %v1454 = vld [vmem:[#allocation6 + $0x10] ss:$0 sm:$0xff]
    %v1455 = vmul.f32 %v1452, %v1454
    %v1456 = vmul.f32 %v1453, %v1454
    %v1457 = vld [vmem:[#allocation6 + $0x18] ss:$0 sm:$0xff]
    %v1458 = vadd.f32 %v1455, %v1457
    %v1459 = vadd.f32 %v1456, %v1457
    %v1460 = vpack.c.bf16 %v1459, %v1458
    %v1461 = vld [vmem:[#allocation4 + $0x1a0] sm:$0xf]
    %v1462 = vld [vmem:[#allocation4 + $0x1a8] sm:$0xf]
    %v1463 = vld [vmem:[#allocation4 + $0x1b0] sm:$0xf]
    %v1464 = vld [vmem:[#allocation4 + $0x1b8] sm:$0xf]
    %v1465 = vld [vmem:[#allocation6 + $0x11] ss:$0 sm:$0xff]
    %v1470 = vunpack.c.l.b16 %v1461
    %v1471 = vunpack.c.l.b16 %v1462
    %v1472 = vunpack.c.l.b16 %v1463
    %v1473 = vunpack.c.l.b16 %v1464
    %v1474 = vpack.c.b16 %v1471, %v1470
    %v1475 = vpack.c.b16 %v1473, %v1472
    %v1479 = vsel %vm471, %v1460, 0
    %1481 = vmatprep.subr.bf16.mxu0 0
    %1482 = vmatpush1.bf16.msra.mxu0 %v1474
    %1483 = vmatprep.subr.bf16.mxu0 0
    %1484 = vmatpush1.bf16.msra.mxu0 %v1475
    %1485 = vmatprep.subr.bf16.mxu0 0
    %1486 = vmatpush1.bf16.msra.mxu0 0
    %1487 = vmatprep.subr.bf16.mxu0 0
    %1488 = vmatpush1.bf16.msra.mxu0 0
    %1489 = vmatprep.subr.bf16.mxu0 0
    %1490 = vmatpush1.bf16.msra.mxu0 0
    %1491 = vmatprep.subr.bf16.mxu0 0
    %1492 = vmatpush1.bf16.msra.mxu0 0
    %1493 = vmatprep.subr.bf16.mxu0 0
    %1494 = vmatpush1.bf16.msra.mxu0 0
    %1495 = vmatprep.subr.bf16.mxu0 0
    %1496 = vmatpush1.bf16.msra.mxu0 0
    %1497 = vmatprep.subr.bf16.mxu0 0
    %1498 = vmatpush1.bf16.msra.mxu0 0
    %1499 = vmatprep.subr.bf16.mxu0 0
    %1500 = vmatpush1.bf16.msra.mxu0 0
    %1501 = vmatprep.subr.bf16.mxu0 0
    %1502 = vmatpush1.bf16.msra.mxu0 0
    %1503 = vmatprep.subr.bf16.mxu0 0
    %1504 = vmatpush1.bf16.msra.mxu0 0
    %1505 = vmatprep.subr.bf16.mxu0 0
    %1506 = vmatpush1.bf16.msra.mxu0 0
    %1507 = vmatprep.subr.bf16.mxu0 0
    %1508 = vmatpush1.bf16.msra.mxu0 0
    %1509 = vmatprep.subr.bf16.mxu0 0
    %1510 = vmatpush1.bf16.msra.mxu0 0
    %1511 = vmatprep.subr.bf16.mxu0 0
    %1512 = vmatpush1.bf16.msra.mxu0 0
    %1513 = vmatprep.mubr.bf16.mxu0 0
    %1514 = vmatmul.mubr.bf16.gmra.mrb[0].mxu0 %v1479
    %v1515 = vpop.f32.mrb[0].mxu0
    %v1516 = vadd.f32 %v1465, %v1515
    %v1517 = vpop.f32.mrb[0].mxu0
    %v1518 = vpop.f32.mrb[0].mxu0
    %v1519 = vadd.f32 %v1465, %v1518
    %v1520 = vpop.f32.mrb[0].mxu0
    %1521 = vdwg.mxu0
    %v1522 = vtanh.pop %v1516
    %v1523 = vtanh.pop %v1519
    %v1524 = vld [vmem:[#allocation6 + $0x19] ss:$0 sm:$0xff]
    %v1525 = vmul.f32 %v1522, %v1524
    %v1526 = vmul.f32 %v1523, %v1524
    %v1527 = vsel %vm471, %v1525, 0.0
    %1528 = vadd.xlane.f32.xlu0 %v1527
    %v1529 = vpop.xlane.xlu0 %1528
    %v1530 = vsel %vm471, %v1526, 0.0
    %1531 = vadd.xlane.f32.xlu0 %v1530
    %v1532 = vpop.xlane.xlu0 %1531
    %v1533 = vld [vmem:[#allocation6 + $0x12] ss:$0 sm:$0xff]
    %1535 = vset.pattern.permute.xlu0 0
    %1536 = vperm.xlu0 %1535, %v1533
    %v1537 = vpop.permute.xlu0 %1536
    %v1539 = vadd.f32 %v1529, %v1537
    %v1540 = vadd.f32 %v1532, %v1537
    %v1543 = vlaneseq
    %v1544 = vand.u32 %v1543, 127
    %v1545 = vlaneseq
    %v1546 = vshrl.u32 %v1545, 7
    %v1547 = vsub.s32 %v1544, %v1546
    %v1548 = vrot.slane %v1539, %v1547
    %v1549 = vlaneseq
    %v1550 = vshrl.u32 %v1549, 7
    %v1551 = vsub.s32 %v1544, %v1550
    %v1552 = vrot.slane %v1540, %v1551
    %vm1553 = vcmask 1041409
    %v1554 = vsel %vm1553, %v1552, %v1548
    %vm1556 = vcmask 58368
    %v1557 = vsel %vm1556, %v1554, -inf
    %1558 = vmax.xlane.f32.xlu0 %v1557
    %v1559 = vpop.xlane.xlu0 %1558
    %v1561 = vlaneseq
    %v1562 = vshrl.u32 %v1561, 7
    %v1563 = vsub.s32 0, %v1562
    %v1564 = vrot.slane %v1559, %v1563
    %v1565 = vlaneseq
    %v1566 = vshrl.u32 %v1565, 7
    %v1567 = vsub.s32 1, %v1566
    %v1568 = vrot.slane %v1559, %v1567
    %v1571 = vsub.f32 %v1539, %v1564
    %v1572 = vsub.f32 %v1540, %v1568
    %v1573 = vmul.f32 %v1571, 1.442695
    %v1574 = vpow.pop %v1573
    %v1575 = vmul.f32 %v1572, 1.442695
    %v1576 = vpow.pop %v1575
    %1579 = vset.pattern.permute.xlu0 0
    %1580 = vperm.xlu0 %1579, %v1574
    %v1581 = vpop.permute.xlu0 %1580
    %1582 = vset.pattern.permute.xlu0 0
    %1583 = vperm.xlu0 %1582, %v1576
    %v1584 = vpop.permute.xlu0 %1583
    %v1585 = vlaneseq
    %v1586 = vshrl.u32 %v1585, 7
    %v1587 = vsub.s32 %v1544, %v1586
    %v1588 = vrot.slane %v1581, %v1587
    %v1589 = vlaneseq
    %v1590 = vshrl.u32 %v1589, 7
    %v1591 = vsub.s32 %v1544, %v1590
    %v1592 = vrot.slane %v1584, %v1591
    %v1593 = vsel %vm1553, %v1592, %v1588
    %v1595 = vsel %vm1556, %v1593, 0.0
    %1596 = vadd.xlane.f32.xlu0 %v1595
    %v1597 = vpop.xlane.xlu0 %1596
    %v1599 = vlaneseq
    %v1600 = vshrl.u32 %v1599, 7
    %v1601 = vsub.s32 0, %v1600
    %v1602 = vrot.slane %v1597, %v1601
    %v1603 = vlaneseq
    %v1604 = vshrl.u32 %v1603, 7
    %v1605 = vsub.s32 1, %v1604
    %v1606 = vrot.slane %v1597, %v1605
    %v1609 = vrcp.pop %v1602
    %v1610 = vmul.f32 %v1574, %v1609
    %v1611 = vrcp.pop %v1606
    %v1612 = vmul.f32 %v1576, %v1611
    %1614 = vset.pattern.permute.xlu0 0
    %1615 = vperm.xlu0 %1614, %v1610
    %v1616 = vpop.permute.xlu0 %1615
    %1619 = vset.pattern.permute.xlu0 0
    %1620 = vperm.xlu0 %1619, %v1612
    %v1621 = vpop.permute.xlu0 %1620
    %v1623 = vmul.f32 %v1616, %v1458
    %v1624 = vmul.f32 %v1621, %v1459
    %v1625 = vsel %vm471, %v1623, 0.0
    %v1626 = vrot.slane %v1625, 4
    %v1627 = vadd.f32 %v1625, %v1626
    %v1628 = vrot.slane %v1627, 2
    %v1629 = vadd.f32 %v1627, %v1628
    %v1630 = vrot.slane %v1629, 1
    %v1631 = vadd.f32 %v1629, %v1630
    %v1632 = vsel %vm471, %v1624, 0.0
    %v1633 = vrot.slane %v1632, 4
    %v1634 = vadd.f32 %v1632, %v1633
    %v1635 = vrot.slane %v1634, 2
    %v1636 = vadd.f32 %v1634, %v1635
    %v1637 = vrot.slane %v1636, 1
    %v1638 = vadd.f32 %v1636, %v1637
    %v1639 = vpack.c.bf16 %v1631, %v1631
    %v1640 = vpack.c.bf16 %v1638, %v1638
    %v1641 = vld [vmem:[#allocation4 + $0x1a4] sm:$0xf]
    %v1642 = vld [vmem:[#allocation4 + $0x1ac] sm:$0xf]
    %v1643 = vld [vmem:[#allocation4 + $0x1b4] sm:$0xf]
    %v1644 = vld [vmem:[#allocation4 + $0x1bc] sm:$0xf]
    %v1645 = vld [vmem:[#allocation6 + $0x1a] ss:$0 sm:$0xff]
    %v1648 = vunpack.c.l.b16 %v1639
    %v1649 = vunpack.c.l.b16 %v1640
    %v1650 = vsel %vm1553, %v1649, %v1648
    %v1651 = vpack.c.b16 %v1650, %v1650
    %v1656 = vunpack.c.l.b16 %v1641
    %v1657 = vunpack.c.l.b16 %v1642
    %v1658 = vunpack.c.l.b16 %v1643
    %v1659 = vunpack.c.l.b16 %v1644
    %v1660 = vpack.c.b16 %v1657, %v1656
    %v1661 = vpack.c.b16 %v1659, %v1658
    %v1665 = vsel %vm471, %v1651, 0
    %1667 = vmatprep.subr.bf16.mxu0 0
    %1668 = vmatpush1.bf16.msra.mxu0 %v1660
    %1669 = vmatprep.subr.bf16.mxu0 0
    %1670 = vmatpush1.bf16.msra.mxu0 %v1661
    %1671 = vmatprep.subr.bf16.mxu0 0
    %1672 = vmatpush1.bf16.msra.mxu0 0
    %1673 = vmatprep.subr.bf16.mxu0 0
    %1674 = vmatpush1.bf16.msra.mxu0 0
    %1675 = vmatprep.subr.bf16.mxu0 0
    %1676 = vmatpush1.bf16.msra.mxu0 0
    %1677 = vmatprep.subr.bf16.mxu0 0
    %1678 = vmatpush1.bf16.msra.mxu0 0
    %1679 = vmatprep.subr.bf16.mxu0 0
    %1680 = vmatpush1.bf16.msra.mxu0 0
    %1681 = vmatprep.subr.bf16.mxu0 0
    %1682 = vmatpush1.bf16.msra.mxu0 0
    %1683 = vmatprep.subr.bf16.mxu0 0
    %1684 = vmatpush1.bf16.msra.mxu0 0
    %1685 = vmatprep.subr.bf16.mxu0 0
    %1686 = vmatpush1.bf16.msra.mxu0 0
    %1687 = vmatprep.subr.bf16.mxu0 0
    %1688 = vmatpush1.bf16.msra.mxu0 0
    %1689 = vmatprep.subr.bf16.mxu0 0
    %1690 = vmatpush1.bf16.msra.mxu0 0
    %1691 = vmatprep.subr.bf16.mxu0 0
    %1692 = vmatpush1.bf16.msra.mxu0 0
    %1693 = vmatprep.subr.bf16.mxu0 0
    %1694 = vmatpush1.bf16.msra.mxu0 0
    %1695 = vmatprep.subr.bf16.mxu0 0
    %1696 = vmatpush1.bf16.msra.mxu0 0
    %1697 = vmatprep.subr.bf16.mxu0 0
    %1698 = vmatpush1.bf16.msra.mxu0 0
    %1699 = vmatprep.mubr.bf16.mxu0 0
    %1700 = vmatmul.mubr.bf16.gmra.mrb[0].mxu0 %v1665
    %v1701 = vpop.f32.mrb[0].mxu0
    %v1702 = vadd.f32 %v1645, %v1701
    %v1703 = vpop.f32.mrb[0].mxu0
    %v1704 = vpop.f32.mrb[0].mxu0
    %v1705 = vpop.f32.mrb[0].mxu0
    %1706 = vdwg.mxu0
    %v1707 = vadd.s32 %v1544, 4294967292
    %v1708 = vlaneseq
    %v1709 = vshrl.u32 %v1708, 7
    %v1710 = vsub.s32 %v1707, %v1709
    %v1711 = vrot.slane %v1616, %v1710
    %v1712 = vlaneseq
    %v1713 = vshrl.u32 %v1712, 7
    %v1714 = vsub.s32 %v1707, %v1713
    %v1715 = vrot.slane %v1621, %v1714
    %v1716 = vsel %vm1553, %v1715, %v1711
    %vm1718 = vcmask 31744
    %v1719 = vsel %vm1718, %v1702, %v1716
    %vm1720 = vcmask 91136
    %1721 = vst.msk [vmem:[%s3] sm:$0x3] %vm1720, %v1719
    // Predicated region
    $region26: #{genomic_transformer_forward.1} parent=1 // pred_check
      _
    $region27: #{genomic_transformer_forward.1} parent=1 // pred_check_branch
      %1723 = sbr.rel (0) target = $region29
    $region28: #{genomic_transformer_forward.1} parent=1 // pred_region
      _
    $region29: #{genomic_transformer_forward.1} parent=1 // pred_fallthru
      _
    // Predicated region
    $region30: #{genomic_transformer_forward.1} parent=1 // pred_check
      _
    $region31: #{genomic_transformer_forward.1} parent=1 // pred_check_branch
      %1725 = sbr.rel (0) target = $region33
    $region32: #{genomic_transformer_forward.1} parent=1 // pred_region
      _
    $region33: #{genomic_transformer_forward.1} parent=1 // pred_fallthru
      _
    %1726 = vsyncpa [#allocation3], 1
    %1727 = vsyncpa [#allocation5], 1

</llo_original>
